<compile_context>
chip_gen: v7x
topology: tpu7x:2x2x1
jax: 0.10.0
libtpu: 0.0.40
codegen_flags: <defaults>
</compile_context>

<pallas_src>
import jax
import jax.numpy as jnp
import numpy as np
from jax.experimental import pallas as pl
from jax.experimental.pallas import tpu as pltpu


# ----------------------------- fused Pallas kernel ---------------------------

def make_tsmamba_kernel(num_layers, T, Bp, H):
    """Build the fused (num_layers x LSTM) + Linear forward kernel.

    Bp is the sublane-padded batch (multiple of 8)."""

    def kernel(*args):
        # args = x_ref, (wih_t, whh_t, bias) * num_layers, fcw_t, fcb,
        #        out_ref, seq_scr
        x_ref = args[0]
        w_refs = args[1:1 + 3 * num_layers]
        fcw_ref = args[1 + 3 * num_layers]
        fcb_ref = args[2 + 3 * num_layers]
        out_ref = args[3 + 3 * num_layers]
        seq_scr = args[4 + 3 * num_layers]

        x_seq = x_ref[...]                          # (T*Bp, D_in), time-major flat

        h = jnp.zeros((Bp, H), jnp.float32)
        for layer in range(num_layers):
            wih_t = w_refs[3 * layer][...]          # (D_l, 4H)  pre-transposed
            whh_t = w_refs[3 * layer + 1][...]      # (H,   4H)  pre-transposed
            bias = w_refs[3 * layer + 2][...]       # (1,   4H)  b_ih + b_hh

            # Hoisted input projection: one matmul covering all T timesteps,
            # off the sequential critical path of the recurrence.
            gx = jnp.dot(x_seq, wih_t,
                         preferred_element_type=jnp.float32) + bias   # (T*Bp, 4H)

            h = jnp.zeros((Bp, H), jnp.float32)
            c = jnp.zeros((Bp, H), jnp.float32)
            last = layer == num_layers - 1

            # T is a static Python int -> fully unrolled recurrence with
            # static, 8-sublane-aligned row offsets.
            for t in range(T):
                gates = gx[t * Bp:(t + 1) * Bp, :] + jnp.dot(
                    h, whh_t, preferred_element_type=jnp.float32)     # (Bp, 4H)
                sig = jax.nn.sigmoid(gates)         # one whole-width EUP pass
                i_g = sig[:, 0:H]
                f_g = sig[:, H:2 * H]
                o_g = sig[:, 3 * H:4 * H]
                g_g = jnp.tanh(gates[:, 2 * H:3 * H])
                c = f_g * c + i_g * g_g
                h = o_g * jnp.tanh(c)
                if not last:
                    # Intermediate sequence stays in VMEM scratch; the final
                    # layer only needs h at t = T-1, so its stores are skipped.
                    seq_scr[t * Bp:(t + 1) * Bp, :] = h

            if not last:
                x_seq = seq_scr[...]                # (T*Bp, H) feeds next layer

        # Fused final Linear: out = h_last @ W_fc^T + b_fc
        out_ref[...] = (jnp.dot(h, fcw_ref[...],
                                preferred_element_type=jnp.float32)
                        + fcb_ref[...])

    return kernel


# --------------------------------- wrapper -----------------------------------

def tsmamba_forward(x, params):
    """x: (B, T, input_size), batch-first like the PyTorch module."""
    B, T, Din = x.shape
    num_layers = len(params["lstm"])
    H = params["lstm"][0][1].shape[1]
    O = params["fc_w"].shape[0]

    # Sublane-pad the batch so every per-step tile is (8k, lanes)-aligned.
    Bp = max(8, ((B + 7) // 8) * 8)

    # Layout plumbing in the wrapper (free for the kernel): time-major,
    # batch-padded flatten + weight pre-transposition so the kernel never
    # transposes on the XLU and never issues masked sublane stores.
    x_tm = jnp.transpose(x, (1, 0, 2)).astype(jnp.float32)          # (T, B, Din)
    x_tm = jnp.pad(x_tm, ((0, 0), (0, Bp - B), (0, 0)))             # (T, Bp, Din)
    x_flat = x_tm.reshape(T * Bp, Din)

    inputs = [x_flat]
    in_specs = [pl.BlockSpec((T * Bp, Din), lambda i: (0, 0))]
    for (w_ih, w_hh, b_ih, b_hh) in params["lstm"]:
        d_l = w_ih.shape[1]
        inputs += [w_ih.T.astype(jnp.float32),
                   w_hh.T.astype(jnp.float32),
                   (b_ih + b_hh).reshape(1, -1).astype(jnp.float32)]
        in_specs += [pl.BlockSpec((d_l, 4 * H), lambda i: (0, 0)),
                     pl.BlockSpec((H, 4 * H), lambda i: (0, 0)),
                     pl.BlockSpec((1, 4 * H), lambda i: (0, 0))]
    inputs += [params["fc_w"].T.astype(jnp.float32),
               params["fc_b"].reshape(1, -1).astype(jnp.float32)]
    in_specs += [pl.BlockSpec((H, O), lambda i: (0, 0)),
                 pl.BlockSpec((1, O), lambda i: (0, 0))]

    out_padded = pl.pallas_call(
        make_tsmamba_kernel(num_layers, T, Bp, H),
        out_shape=jax.ShapeDtypeStruct((Bp, O), jnp.float32),
        grid=(1,),
        in_specs=in_specs,
        out_specs=pl.BlockSpec((Bp, O), lambda i: (0, 0)),
        scratch_shapes=[pltpu.VMEM((T * Bp, H), jnp.float32)],
        compiler_params=pltpu.CompilerParams(
            dimension_semantics=("arbitrary",)),
    )(*inputs)
    return out_padded[:B]


# --------------------------- pure-JAX reference -------------------------------

def tsmamba_reference(x, params):
    B, T, _ = x.shape
    h_seq = x.astype(jnp.float32)
    for (w_ih, w_hh, b_ih, b_hh) in params["lstm"]:
        H = w_hh.shape[1]
        h = jnp.zeros((B, H), jnp.float32)
        c = jnp.zeros((B, H), jnp.float32)
        outs = []
        for t in range(T):
            g = h_seq[:, t, :] @ w_ih.T + h @ w_hh.T + b_ih + b_hh
            i_g = jax.nn.sigmoid(g[:, 0:H])
            f_g = jax.nn.sigmoid(g[:, H:2 * H])
            g_g = jnp.tanh(g[:, 2 * H:3 * H])
            o_g = jax.nn.sigmoid(g[:, 3 * H:4 * H])
            c = f_g * c + i_g * g_g
            h = o_g * jnp.tanh(c)
            outs.append(h)
        h_seq = jnp.stack(outs, axis=1)
    return h_seq[:, -1, :] @ params["fc_w"].T + params["fc_b"]


# ------------------------------------ init ------------------------------------

def init_params(key, input_size, hidden_size, output_size, num_layers):
    k = 1.0 / np.sqrt(hidden_size)
    layers = []
    for layer in range(num_layers):
        din = input_size if layer == 0 else hidden_size
        key, k0, k1, k2, k3 = jax.random.split(key, 5)
        layers.append((
            jax.random.uniform(k0, (4 * hidden_size, din), jnp.float32, -k, k),
            jax.random.uniform(k1, (4 * hidden_size, hidden_size), jnp.float32, -k, k),
            jax.random.uniform(k2, (4 * hidden_size,), jnp.float32, -k, k),
            jax.random.uniform(k3, (4 * hidden_size,), jnp.float32, -k, k),
        ))
    key, kw, kb = jax.random.split(key, 3)
    fc_w = jax.random.uniform(kw, (output_size, hidden_size), jnp.float32, -k, k)
    fc_b = jax.random.uniform(kb, (output_size,), jnp.float32, -k, k)
    return {"lstm": layers, "fc_w": fc_w, "fc_b": fc_b}


# ------------------------------------ main -------------------------------------

if __name__ == "__main__":
    # Small shapes implied by the forward: x is (batch, seq, input_size).
    B, T = 2, 8
    input_size, hidden_size, output_size, num_layers = 4, 32, 4, 2

    key = jax.random.PRNGKey(0)
    key, kx = jax.random.split(key)
    x = jax.random.normal(kx, (B, T, input_size), jnp.float32)
    params = init_params(key, input_size, hidden_size, output_size, num_layers)

    out = tsmamba_forward(x, params)
    out = jax.block_until_ready(out)

    ref = tsmamba_reference(x, params)
    np.testing.assert_allclose(np.asarray(out), np.asarray(ref),
                               rtol=1e-4, atol=1e-4)

    print("KERNEL_OK")
</pallas_src>

<mosaic_0001>
module attributes {stable_mosaic.version = 11 : i64} {
  func.func @kernel(%arg0: i32, %arg1: memref<64x4xf32, #tpu.memory_space<vmem>>, %arg2: memref<4x128xf32, #tpu.memory_space<vmem>>, %arg3: memref<32x128xf32, #tpu.memory_space<vmem>>, %arg4: memref<1x128xf32, #tpu.memory_space<vmem>>, %arg5: memref<32x128xf32, #tpu.memory_space<vmem>>, %arg6: memref<32x128xf32, #tpu.memory_space<vmem>>, %arg7: memref<1x128xf32, #tpu.memory_space<vmem>>, %arg8: memref<32x4xf32, #tpu.memory_space<vmem>>, %arg9: memref<1x4xf32, #tpu.memory_space<vmem>>, %arg10: memref<8x4xf32, #tpu.memory_space<vmem>>, %arg11: memref<64x32xf32, #tpu.memory_space<vmem>>) attributes {dimension_semantics = [#tpu.dimension_semantics<arbitrary>], iteration_bounds = array<i64: 1>, scalar_prefetch = 0 : i64, scratch_operands = 1 : i64, tpu.core_type = #tpu.core_type<tc>, window_params = [{pipeline_mode = #tpu.pipeline_mode<synchronous>, transform_indices = @transform_0, window_bounds = array<i64: 64, 4>}, {pipeline_mode = #tpu.pipeline_mode<synchronous>, transform_indices = @transform_1, window_bounds = array<i64: 4, 128>}, {pipeline_mode = #tpu.pipeline_mode<synchronous>, transform_indices = @transform_2, window_bounds = array<i64: 32, 128>}, {pipeline_mode = #tpu.pipeline_mode<synchronous>, transform_indices = @transform_3, window_bounds = array<i64: 1, 128>}, {pipeline_mode = #tpu.pipeline_mode<synchronous>, transform_indices = @transform_4, window_bounds = array<i64: 32, 128>}, {pipeline_mode = #tpu.pipeline_mode<synchronous>, transform_indices = @transform_5, window_bounds = array<i64: 32, 128>}, {pipeline_mode = #tpu.pipeline_mode<synchronous>, transform_indices = @transform_6, window_bounds = array<i64: 1, 128>}, {pipeline_mode = #tpu.pipeline_mode<synchronous>, transform_indices = @transform_7, window_bounds = array<i64: 32, 4>}, {pipeline_mode = #tpu.pipeline_mode<synchronous>, transform_indices = @transform_8, window_bounds = array<i64: 1, 4>}, {pipeline_mode = #tpu.pipeline_mode<synchronous>, transform_indices = @transform_9, window_bounds = array<i64: 8, 4>}]} {
    %c0 = arith.constant 0 : index
    %c0_0 = arith.constant 0 : index
    %0 = vector.load %arg1[%c0, %c0_0] : memref<64x4xf32, #tpu.memory_space<vmem>>, vector<64x4xf32>
    %c0_1 = arith.constant 0 : index
    %c0_2 = arith.constant 0 : index
    %1 = vector.load %arg2[%c0_1, %c0_2] : memref<4x128xf32, #tpu.memory_space<vmem>>, vector<4x128xf32>
    %c0_3 = arith.constant 0 : index
    %c0_4 = arith.constant 0 : index
    %2 = vector.load %arg3[%c0_3, %c0_4] : memref<32x128xf32, #tpu.memory_space<vmem>>, vector<32x128xf32>
    %c0_5 = arith.constant 0 : index
    %c0_6 = arith.constant 0 : index
    %3 = vector.load %arg4[%c0_5, %c0_6] : memref<1x128xf32, #tpu.memory_space<vmem>>, vector<1x128xf32>
    %cst = arith.constant dense<0.000000e+00> : vector<64x128xf32>
    %4 = tpu.matmul %0, %1, %cst {dimension_numbers = #tpu.dot_dimension_numbers<[1], [0], [0], [1], [0, 0, 1, 1], [], []>} : vector<64x4xf32>, vector<4x128xf32>, vector<64x128xf32> -> vector<64x128xf32>
    %5 = vector.broadcast %3 : vector<1x128xf32> to vector<64x128xf32>
    %6 = arith.addf %4, %5 : vector<64x128xf32>
    %cst_7 = arith.constant 0.000000e+00 : f32
    %7 = vector.broadcast %cst_7 : f32 to vector<8x32xf32>
    %cst_8 = arith.constant 0.000000e+00 : f32
    %8 = vector.broadcast %cst_8 : f32 to vector<8x32xf32>
    %9 = vector.extract_strided_slice %6 {offsets = [0, 0], sizes = [8, 128], strides = [1, 1]} : vector<64x128xf32> to vector<8x128xf32>
    %cst_9 = arith.constant dense<0.000000e+00> : vector<8x128xf32>
    %10 = tpu.matmul %7, %2, %cst_9 {dimension_numbers = #tpu.dot_dimension_numbers<[1], [0], [0], [1], [0, 0, 1, 1], [], []>} : vector<8x32xf32>, vector<32x128xf32>, vector<8x128xf32> -> vector<8x128xf32>
    %11 = arith.addf %9, %10 : vector<8x128xf32>
    %12 = arith.negf %11 : vector<8x128xf32>
    %13 = math.exp %12 : vector<8x128xf32>
    %cst_10 = arith.constant 1.000000e+00 : f32
    %14 = vector.broadcast %cst_10 : f32 to vector<8x128xf32>
    %15 = arith.addf %14, %13 : vector<8x128xf32>
    %16 = arith.divf %14, %15 : vector<8x128xf32>
    %17 = vector.extract_strided_slice %16 {offsets = [0, 0], sizes = [8, 32], strides = [1, 1]} : vector<8x128xf32> to vector<8x32xf32>
    %18 = vector.extract_strided_slice %16 {offsets = [0, 32], sizes = [8, 32], strides = [1, 1]} : vector<8x128xf32> to vector<8x32xf32>
    %19 = vector.extract_strided_slice %16 {offsets = [0, 96], sizes = [8, 32], strides = [1, 1]} : vector<8x128xf32> to vector<8x32xf32>
    %20 = vector.extract_strided_slice %11 {offsets = [0, 64], sizes = [8, 32], strides = [1, 1]} : vector<8x128xf32> to vector<8x32xf32>
    %21 = math.tanh %20 : vector<8x32xf32>
    %22 = arith.mulf %18, %8 : vector<8x32xf32>
    %23 = arith.mulf %17, %21 : vector<8x32xf32>
    %24 = arith.addf %22, %23 : vector<8x32xf32>
    %25 = math.tanh %24 : vector<8x32xf32>
    %26 = arith.mulf %19, %25 : vector<8x32xf32>
    %c0_11 = arith.constant 0 : index
    %c0_12 = arith.constant 0 : index
    %27 = vector.load %arg11[%c0_11, %c0_12] : memref<64x32xf32, #tpu.memory_space<vmem>>, vector<8x32xf32>
    tpu.vector_store %arg11[%c0_11, %c0_12], %26 {strides = array<i32>} : memref<64x32xf32, #tpu.memory_space<vmem>>, vector<8x32xf32>,
    %28 = vector.extract_strided_slice %6 {offsets = [8, 0], sizes = [8, 128], strides = [1, 1]} : vector<64x128xf32> to vector<8x128xf32>
    %cst_13 = arith.constant dense<0.000000e+00> : vector<8x128xf32>
    %29 = tpu.matmul %26, %2, %cst_13 {dimension_numbers = #tpu.dot_dimension_numbers<[1], [0], [0], [1], [0, 0, 1, 1], [], []>} : vector<8x32xf32>, vector<32x128xf32>, vector<8x128xf32> -> vector<8x128xf32>
    %30 = arith.addf %28, %29 : vector<8x128xf32>
    %31 = arith.negf %30 : vector<8x128xf32>
    %32 = math.exp %31 : vector<8x128xf32>
    %cst_14 = arith.constant 1.000000e+00 : f32
    %33 = vector.broadcast %cst_14 : f32 to vector<8x128xf32>
    %34 = arith.addf %33, %32 : vector<8x128xf32>
    %35 = arith.divf %33, %34 : vector<8x128xf32>
    %36 = vector.extract_strided_slice %35 {offsets = [0, 0], sizes = [8, 32], strides = [1, 1]} : vector<8x128xf32> to vector<8x32xf32>
    %37 = vector.extract_strided_slice %35 {offsets = [0, 32], sizes = [8, 32], strides = [1, 1]} : vector<8x128xf32> to vector<8x32xf32>
    %38 = vector.extract_strided_slice %35 {offsets = [0, 96], sizes = [8, 32], strides = [1, 1]} : vector<8x128xf32> to vector<8x32xf32>
    %39 = vector.extract_strided_slice %30 {offsets = [0, 64], sizes = [8, 32], strides = [1, 1]} : vector<8x128xf32> to vector<8x32xf32>
    %40 = math.tanh %39 : vector<8x32xf32>
    %41 = arith.mulf %37, %24 : vector<8x32xf32>
    %42 = arith.mulf %36, %40 : vector<8x32xf32>
    %43 = arith.addf %41, %42 : vector<8x32xf32>
    %44 = math.tanh %43 : vector<8x32xf32>
    %45 = arith.mulf %38, %44 : vector<8x32xf32>
    %c8 = arith.constant 8 : index
    %c0_15 = arith.constant 0 : index
    %46 = vector.load %arg11[%c8, %c0_15] : memref<64x32xf32, #tpu.memory_space<vmem>>, vector<8x32xf32>
    tpu.vector_store %arg11[%c8, %c0_15], %45 {strides = array<i32>} : memref<64x32xf32, #tpu.memory_space<vmem>>, vector<8x32xf32>,
    %47 = vector.extract_strided_slice %6 {offsets = [16, 0], sizes = [8, 128], strides = [1, 1]} : vector<64x128xf32> to vector<8x128xf32>
    %cst_16 = arith.constant dense<0.000000e+00> : vector<8x128xf32>
    %48 = tpu.matmul %45, %2, %cst_16 {dimension_numbers = #tpu.dot_dimension_numbers<[1], [0], [0], [1], [0, 0, 1, 1], [], []>} : vector<8x32xf32>, vector<32x128xf32>, vector<8x128xf32> -> vector<8x128xf32>
    %49 = arith.addf %47, %48 : vector<8x128xf32>
    %50 = arith.negf %49 : vector<8x128xf32>
    %51 = math.exp %50 : vector<8x128xf32>
    %cst_17 = arith.constant 1.000000e+00 : f32
    %52 = vector.broadcast %cst_17 : f32 to vector<8x128xf32>
    %53 = arith.addf %52, %51 : vector<8x128xf32>
    %54 = arith.divf %52, %53 : vector<8x128xf32>
    %55 = vector.extract_strided_slice %54 {offsets = [0, 0], sizes = [8, 32], strides = [1, 1]} : vector<8x128xf32> to vector<8x32xf32>
    %56 = vector.extract_strided_slice %54 {offsets = [0, 32], sizes = [8, 32], strides = [1, 1]} : vector<8x128xf32> to vector<8x32xf32>
    %57 = vector.extract_strided_slice %54 {offsets = [0, 96], sizes = [8, 32], strides = [1, 1]} : vector<8x128xf32> to vector<8x32xf32>
    %58 = vector.extract_strided_slice %49 {offsets = [0, 64], sizes = [8, 32], strides = [1, 1]} : vector<8x128xf32> to vector<8x32xf32>
    %59 = math.tanh %58 : vector<8x32xf32>
    %60 = arith.mulf %56, %43 : vector<8x32xf32>
    %61 = arith.mulf %55, %59 : vector<8x32xf32>
    %62 = arith.addf %60, %61 : vector<8x32xf32>
    %63 = math.tanh %62 : vector<8x32xf32>
    %64 = arith.mulf %57, %63 : vector<8x32xf32>
    %c16 = arith.constant 16 : index
    %c0_18 = arith.constant 0 : index
    %65 = vector.load %arg11[%c16, %c0_18] : memref<64x32xf32, #tpu.memory_space<vmem>>, vector<8x32xf32>
    tpu.vector_store %arg11[%c16, %c0_18], %64 {strides = array<i32>} : memref<64x32xf32, #tpu.memory_space<vmem>>, vector<8x32xf32>,
    %66 = vector.extract_strided_slice %6 {offsets = [24, 0], sizes = [8, 128], strides = [1, 1]} : vector<64x128xf32> to vector<8x128xf32>
    %cst_19 = arith.constant dense<0.000000e+00> : vector<8x128xf32>
    %67 = tpu.matmul %64, %2, %cst_19 {dimension_numbers = #tpu.dot_dimension_numbers<[1], [0], [0], [1], [0, 0, 1, 1], [], []>} : vector<8x32xf32>, vector<32x128xf32>, vector<8x128xf32> -> vector<8x128xf32>
    %68 = arith.addf %66, %67 : vector<8x128xf32>
    %69 = arith.negf %68 : vector<8x128xf32>
    %70 = math.exp %69 : vector<8x128xf32>
    %cst_20 = arith.constant 1.000000e+00 : f32
    %71 = vector.broadcast %cst_20 : f32 to vector<8x128xf32>
    %72 = arith.addf %71, %70 : vector<8x128xf32>
    %73 = arith.divf %71, %72 : vector<8x128xf32>
    %74 = vector.extract_strided_slice %73 {offsets = [0, 0], sizes = [8, 32], strides = [1, 1]} : vector<8x128xf32> to vector<8x32xf32>
    %75 = vector.extract_strided_slice %73 {offsets = [0, 32], sizes = [8, 32], strides = [1, 1]} : vector<8x128xf32> to vector<8x32xf32>
    %76 = vector.extract_strided_slice %73 {offsets = [0, 96], sizes = [8, 32], strides = [1, 1]} : vector<8x128xf32> to vector<8x32xf32>
    %77 = vector.extract_strided_slice %68 {offsets = [0, 64], sizes = [8, 32], strides = [1, 1]} : vector<8x128xf32> to vector<8x32xf32>
    %78 = math.tanh %77 : vector<8x32xf32>
    %79 = arith.mulf %75, %62 : vector<8x32xf32>
    %80 = arith.mulf %74, %78 : vector<8x32xf32>
    %81 = arith.addf %79, %80 : vector<8x32xf32>
    %82 = math.tanh %81 : vector<8x32xf32>
    %83 = arith.mulf %76, %82 : vector<8x32xf32>
    %c24 = arith.constant 24 : index
    %c0_21 = arith.constant 0 : index
    %84 = vector.load %arg11[%c24, %c0_21] : memref<64x32xf32, #tpu.memory_space<vmem>>, vector<8x32xf32>
    tpu.vector_store %arg11[%c24, %c0_21], %83 {strides = array<i32>} : memref<64x32xf32, #tpu.memory_space<vmem>>, vector<8x32xf32>,
    %85 = vector.extract_strided_slice %6 {offsets = [32, 0], sizes = [8, 128], strides = [1, 1]} : vector<64x128xf32> to vector<8x128xf32>
    %cst_22 = arith.constant dense<0.000000e+00> : vector<8x128xf32>
    %86 = tpu.matmul %83, %2, %cst_22 {dimension_numbers = #tpu.dot_dimension_numbers<[1], [0], [0], [1], [0, 0, 1, 1], [], []>} : vector<8x32xf32>, vector<32x128xf32>, vector<8x128xf32> -> vector<8x128xf32>
    %87 = arith.addf %85, %86 : vector<8x128xf32>
    %88 = arith.negf %87 : vector<8x128xf32>
    %89 = math.exp %88 : vector<8x128xf32>
    %cst_23 = arith.constant 1.000000e+00 : f32
    %90 = vector.broadcast %cst_23 : f32 to vector<8x128xf32>
    %91 = arith.addf %90, %89 : vector<8x128xf32>
    %92 = arith.divf %90, %91 : vector<8x128xf32>
    %93 = vector.extract_strided_slice %92 {offsets = [0, 0], sizes = [8, 32], strides = [1, 1]} : vector<8x128xf32> to vector<8x32xf32>
    %94 = vector.extract_strided_slice %92 {offsets = [0, 32], sizes = [8, 32], strides = [1, 1]} : vector<8x128xf32> to vector<8x32xf32>
    %95 = vector.extract_strided_slice %92 {offsets = [0, 96], sizes = [8, 32], strides = [1, 1]} : vector<8x128xf32> to vector<8x32xf32>
    %96 = vector.extract_strided_slice %87 {offsets = [0, 64], sizes = [8, 32], strides = [1, 1]} : vector<8x128xf32> to vector<8x32xf32>
    %97 = math.tanh %96 : vector<8x32xf32>
    %98 = arith.mulf %94, %81 : vector<8x32xf32>
    %99 = arith.mulf %93, %97 : vector<8x32xf32>
    %100 = arith.addf %98, %99 : vector<8x32xf32>
    %101 = math.tanh %100 : vector<8x32xf32>
    %102 = arith.mulf %95, %101 : vector<8x32xf32>
    %c32 = arith.constant 32 : index
    %c0_24 = arith.constant 0 : index
    %103 = vector.load %arg11[%c32, %c0_24] : memref<64x32xf32, #tpu.memory_space<vmem>>, vector<8x32xf32>
    tpu.vector_store %arg11[%c32, %c0_24], %102 {strides = array<i32>} : memref<64x32xf32, #tpu.memory_space<vmem>>, vector<8x32xf32>,
    %104 = vector.extract_strided_slice %6 {offsets = [40, 0], sizes = [8, 128], strides = [1, 1]} : vector<64x128xf32> to vector<8x128xf32>
    %cst_25 = arith.constant dense<0.000000e+00> : vector<8x128xf32>
    %105 = tpu.matmul %102, %2, %cst_25 {dimension_numbers = #tpu.dot_dimension_numbers<[1], [0], [0], [1], [0, 0, 1, 1], [], []>} : vector<8x32xf32>, vector<32x128xf32>, vector<8x128xf32> -> vector<8x128xf32>
    %106 = arith.addf %104, %105 : vector<8x128xf32>
    %107 = arith.negf %106 : vector<8x128xf32>
    %108 = math.exp %107 : vector<8x128xf32>
    %cst_26 = arith.constant 1.000000e+00 : f32
    %109 = vector.broadcast %cst_26 : f32 to vector<8x128xf32>
    %110 = arith.addf %109, %108 : vector<8x128xf32>
    %111 = arith.divf %109, %110 : vector<8x128xf32>
    %112 = vector.extract_strided_slice %111 {offsets = [0, 0], sizes = [8, 32], strides = [1, 1]} : vector<8x128xf32> to vector<8x32xf32>
    %113 = vector.extract_strided_slice %111 {offsets = [0, 32], sizes = [8, 32], strides = [1, 1]} : vector<8x128xf32> to vector<8x32xf32>
    %114 = vector.extract_strided_slice %111 {offsets = [0, 96], sizes = [8, 32], strides = [1, 1]} : vector<8x128xf32> to vector<8x32xf32>
    %115 = vector.extract_strided_slice %106 {offsets = [0, 64], sizes = [8, 32], strides = [1, 1]} : vector<8x128xf32> to vector<8x32xf32>
    %116 = math.tanh %115 : vector<8x32xf32>
    %117 = arith.mulf %113, %100 : vector<8x32xf32>
    %118 = arith.mulf %112, %116 : vector<8x32xf32>
    %119 = arith.addf %117, %118 : vector<8x32xf32>
    %120 = math.tanh %119 : vector<8x32xf32>
    %121 = arith.mulf %114, %120 : vector<8x32xf32>
    %c40 = arith.constant 40 : index
    %c0_27 = arith.constant 0 : index
    %122 = vector.load %arg11[%c40, %c0_27] : memref<64x32xf32, #tpu.memory_space<vmem>>, vector<8x32xf32>
    tpu.vector_store %arg11[%c40, %c0_27], %121 {strides = array<i32>} : memref<64x32xf32, #tpu.memory_space<vmem>>, vector<8x32xf32>,
    %123 = vector.extract_strided_slice %6 {offsets = [48, 0], sizes = [8, 128], strides = [1, 1]} : vector<64x128xf32> to vector<8x128xf32>
    %cst_28 = arith.constant dense<0.000000e+00> : vector<8x128xf32>
    %124 = tpu.matmul %121, %2, %cst_28 {dimension_numbers = #tpu.dot_dimension_numbers<[1], [0], [0], [1], [0, 0, 1, 1], [], []>} : vector<8x32xf32>, vector<32x128xf32>, vector<8x128xf32> -> vector<8x128xf32>
    %125 = arith.addf %123, %124 : vector<8x128xf32>
    %126 = arith.negf %125 : vector<8x128xf32>
    %127 = math.exp %126 : vector<8x128xf32>
    %cst_29 = arith.constant 1.000000e+00 : f32
    %128 = vector.broadcast %cst_29 : f32 to vector<8x128xf32>
    %129 = arith.addf %128, %127 : vector<8x128xf32>
    %130 = arith.divf %128, %129 : vector<8x128xf32>
    %131 = vector.extract_strided_slice %130 {offsets = [0, 0], sizes = [8, 32], strides = [1, 1]} : vector<8x128xf32> to vector<8x32xf32>
    %132 = vector.extract_strided_slice %130 {offsets = [0, 32], sizes = [8, 32], strides = [1, 1]} : vector<8x128xf32> to vector<8x32xf32>
    %133 = vector.extract_strided_slice %130 {offsets = [0, 96], sizes = [8, 32], strides = [1, 1]} : vector<8x128xf32> to vector<8x32xf32>
    %134 = vector.extract_strided_slice %125 {offsets = [0, 64], sizes = [8, 32], strides = [1, 1]} : vector<8x128xf32> to vector<8x32xf32>
    %135 = math.tanh %134 : vector<8x32xf32>
    %136 = arith.mulf %132, %119 : vector<8x32xf32>
    %137 = arith.mulf %131, %135 : vector<8x32xf32>
    %138 = arith.addf %136, %137 : vector<8x32xf32>
    %139 = math.tanh %138 : vector<8x32xf32>
    %140 = arith.mulf %133, %139 : vector<8x32xf32>
    %c48 = arith.constant 48 : index
    %c0_30 = arith.constant 0 : index
    %141 = vector.load %arg11[%c48, %c0_30] : memref<64x32xf32, #tpu.memory_space<vmem>>, vector<8x32xf32>
    tpu.vector_store %arg11[%c48, %c0_30], %140 {strides = array<i32>} : memref<64x32xf32, #tpu.memory_space<vmem>>, vector<8x32xf32>,
    %142 = vector.extract_strided_slice %6 {offsets = [56, 0], sizes = [8, 128], strides = [1, 1]} : vector<64x128xf32> to vector<8x128xf32>
    %cst_31 = arith.constant dense<0.000000e+00> : vector<8x128xf32>
    %143 = tpu.matmul %140, %2, %cst_31 {dimension_numbers = #tpu.dot_dimension_numbers<[1], [0], [0], [1], [0, 0, 1, 1], [], []>} : vector<8x32xf32>, vector<32x128xf32>, vector<8x128xf32> -> vector<8x128xf32>
    %144 = arith.addf %142, %143 : vector<8x128xf32>
    %145 = arith.negf %144 : vector<8x128xf32>
    %146 = math.exp %145 : vector<8x128xf32>
    %cst_32 = arith.constant 1.000000e+00 : f32
    %147 = vector.broadcast %cst_32 : f32 to vector<8x128xf32>
    %148 = arith.addf %147, %146 : vector<8x128xf32>
    %149 = arith.divf %147, %148 : vector<8x128xf32>
    %150 = vector.extract_strided_slice %149 {offsets = [0, 0], sizes = [8, 32], strides = [1, 1]} : vector<8x128xf32> to vector<8x32xf32>
    %151 = vector.extract_strided_slice %149 {offsets = [0, 32], sizes = [8, 32], strides = [1, 1]} : vector<8x128xf32> to vector<8x32xf32>
    %152 = vector.extract_strided_slice %149 {offsets = [0, 96], sizes = [8, 32], strides = [1, 1]} : vector<8x128xf32> to vector<8x32xf32>
    %153 = vector.extract_strided_slice %144 {offsets = [0, 64], sizes = [8, 32], strides = [1, 1]} : vector<8x128xf32> to vector<8x32xf32>
    %154 = math.tanh %153 : vector<8x32xf32>
    %155 = arith.mulf %151, %138 : vector<8x32xf32>
    %156 = arith.mulf %150, %154 : vector<8x32xf32>
    %157 = arith.addf %155, %156 : vector<8x32xf32>
    %158 = math.tanh %157 : vector<8x32xf32>
    %159 = arith.mulf %152, %158 : vector<8x32xf32>
    %c56 = arith.constant 56 : index
    %c0_33 = arith.constant 0 : index
    %160 = vector.load %arg11[%c56, %c0_33] : memref<64x32xf32, #tpu.memory_space<vmem>>, vector<8x32xf32>
    tpu.vector_store %arg11[%c56, %c0_33], %159 {strides = array<i32>} : memref<64x32xf32, #tpu.memory_space<vmem>>, vector<8x32xf32>,
    %c0_34 = arith.constant 0 : index
    %c0_35 = arith.constant 0 : index
    %161 = vector.load %arg11[%c0_34, %c0_35] : memref<64x32xf32, #tpu.memory_space<vmem>>, vector<64x32xf32>
    %c0_36 = arith.constant 0 : index
    %c0_37 = arith.constant 0 : index
    %162 = vector.load %arg5[%c0_36, %c0_37] : memref<32x128xf32, #tpu.memory_space<vmem>>, vector<32x128xf32>
    %c0_38 = arith.constant 0 : index
    %c0_39 = arith.constant 0 : index
    %163 = vector.load %arg6[%c0_38, %c0_39] : memref<32x128xf32, #tpu.memory_space<vmem>>, vector<32x128xf32>
    %c0_40 = arith.constant 0 : index
    %c0_41 = arith.constant 0 : index
    %164 = vector.load %arg7[%c0_40, %c0_41] : memref<1x128xf32, #tpu.memory_space<vmem>>, vector<1x128xf32>
    %cst_42 = arith.constant dense<0.000000e+00> : vector<64x128xf32>
    %165 = tpu.matmul %161, %162, %cst_42 {dimension_numbers = #tpu.dot_dimension_numbers<[1], [0], [0], [1], [0, 0, 1, 1], [], []>} : vector<64x32xf32>, vector<32x128xf32>, vector<64x128xf32> -> vector<64x128xf32>
    %166 = vector.broadcast %164 : vector<1x128xf32> to vector<64x128xf32>
    %167 = arith.addf %165, %166 : vector<64x128xf32>
    %cst_43 = arith.constant 0.000000e+00 : f32
    %168 = vector.broadcast %cst_43 : f32 to vector<8x32xf32>
    %cst_44 = arith.constant 0.000000e+00 : f32
    %169 = vector.broadcast %cst_44 : f32 to vector<8x32xf32>
    %170 = vector.extract_strided_slice %167 {offsets = [0, 0], sizes = [8, 128], strides = [1, 1]} : vector<64x128xf32> to vector<8x128xf32>
    %cst_45 = arith.constant dense<0.000000e+00> : vector<8x128xf32>
    %171 = tpu.matmul %168, %163, %cst_45 {dimension_numbers = #tpu.dot_dimension_numbers<[1], [0], [0], [1], [0, 0, 1, 1], [], []>} : vector<8x32xf32>, vector<32x128xf32>, vector<8x128xf32> -> vector<8x128xf32>
    %172 = arith.addf %170, %171 : vector<8x128xf32>
    %173 = arith.negf %172 : vector<8x128xf32>
    %174 = math.exp %173 : vector<8x128xf32>
    %cst_46 = arith.constant 1.000000e+00 : f32
    %175 = vector.broadcast %cst_46 : f32 to vector<8x128xf32>
    %176 = arith.addf %175, %174 : vector<8x128xf32>
    %177 = arith.divf %175, %176 : vector<8x128xf32>
    %178 = vector.extract_strided_slice %177 {offsets = [0, 0], sizes = [8, 32], strides = [1, 1]} : vector<8x128xf32> to vector<8x32xf32>
    %179 = vector.extract_strided_slice %177 {offsets = [0, 32], sizes = [8, 32], strides = [1, 1]} : vector<8x128xf32> to vector<8x32xf32>
    %180 = vector.extract_strided_slice %177 {offsets = [0, 96], sizes = [8, 32], strides = [1, 1]} : vector<8x128xf32> to vector<8x32xf32>
    %181 = vector.extract_strided_slice %172 {offsets = [0, 64], sizes = [8, 32], strides = [1, 1]} : vector<8x128xf32> to vector<8x32xf32>
    %182 = math.tanh %181 : vector<8x32xf32>
    %183 = arith.mulf %179, %169 : vector<8x32xf32>
    %184 = arith.mulf %178, %182 : vector<8x32xf32>
    %185 = arith.addf %183, %184 : vector<8x32xf32>
    %186 = math.tanh %185 : vector<8x32xf32>
    %187 = arith.mulf %180, %186 : vector<8x32xf32>
    %188 = vector.extract_strided_slice %167 {offsets = [8, 0], sizes = [8, 128], strides = [1, 1]} : vector<64x128xf32> to vector<8x128xf32>
    %cst_47 = arith.constant dense<0.000000e+00> : vector<8x128xf32>
    %189 = tpu.matmul %187, %163, %cst_47 {dimension_numbers = #tpu.dot_dimension_numbers<[1], [0], [0], [1], [0, 0, 1, 1], [], []>} : vector<8x32xf32>, vector<32x128xf32>, vector<8x128xf32> -> vector<8x128xf32>
    %190 = arith.addf %188, %189 : vector<8x128xf32>
    %191 = arith.negf %190 : vector<8x128xf32>
    %192 = math.exp %191 : vector<8x128xf32>
    %cst_48 = arith.constant 1.000000e+00 : f32
    %193 = vector.broadcast %cst_48 : f32 to vector<8x128xf32>
    %194 = arith.addf %193, %192 : vector<8x128xf32>
    %195 = arith.divf %193, %194 : vector<8x128xf32>
    %196 = vector.extract_strided_slice %195 {offsets = [0, 0], sizes = [8, 32], strides = [1, 1]} : vector<8x128xf32> to vector<8x32xf32>
    %197 = vector.extract_strided_slice %195 {offsets = [0, 32], sizes = [8, 32], strides = [1, 1]} : vector<8x128xf32> to vector<8x32xf32>
    %198 = vector.extract_strided_slice %195 {offsets = [0, 96], sizes = [8, 32], strides = [1, 1]} : vector<8x128xf32> to vector<8x32xf32>
    %199 = vector.extract_strided_slice %190 {offsets = [0, 64], sizes = [8, 32], strides = [1, 1]} : vector<8x128xf32> to vector<8x32xf32>
    %200 = math.tanh %199 : vector<8x32xf32>
    %201 = arith.mulf %197, %185 : vector<8x32xf32>
    %202 = arith.mulf %196, %200 : vector<8x32xf32>
    %203 = arith.addf %201, %202 : vector<8x32xf32>
    %204 = math.tanh %203 : vector<8x32xf32>
    %205 = arith.mulf %198, %204 : vector<8x32xf32>
    %206 = vector.extract_strided_slice %167 {offsets = [16, 0], sizes = [8, 128], strides = [1, 1]} : vector<64x128xf32> to vector<8x128xf32>
    %cst_49 = arith.constant dense<0.000000e+00> : vector<8x128xf32>
    %207 = tpu.matmul %205, %163, %cst_49 {dimension_numbers = #tpu.dot_dimension_numbers<[1], [0], [0], [1], [0, 0, 1, 1], [], []>} : vector<8x32xf32>, vector<32x128xf32>, vector<8x128xf32> -> vector<8x128xf32>
    %208 = arith.addf %206, %207 : vector<8x128xf32>
    %209 = arith.negf %208 : vector<8x128xf32>
    %210 = math.exp %209 : vector<8x128xf32>
    %cst_50 = arith.constant 1.000000e+00 : f32
    %211 = vector.broadcast %cst_50 : f32 to vector<8x128xf32>
    %212 = arith.addf %211, %210 : vector<8x128xf32>
    %213 = arith.divf %211, %212 : vector<8x128xf32>
    %214 = vector.extract_strided_slice %213 {offsets = [0, 0], sizes = [8, 32], strides = [1, 1]} : vector<8x128xf32> to vector<8x32xf32>
    %215 = vector.extract_strided_slice %213 {offsets = [0, 32], sizes = [8, 32], strides = [1, 1]} : vector<8x128xf32> to vector<8x32xf32>
    %216 = vector.extract_strided_slice %213 {offsets = [0, 96], sizes = [8, 32], strides = [1, 1]} : vector<8x128xf32> to vector<8x32xf32>
    %217 = vector.extract_strided_slice %208 {offsets = [0, 64], sizes = [8, 32], strides = [1, 1]} : vector<8x128xf32> to vector<8x32xf32>
    %218 = math.tanh %217 : vector<8x32xf32>
    %219 = arith.mulf %215, %203 : vector<8x32xf32>
    %220 = arith.mulf %214, %218 : vector<8x32xf32>
    %221 = arith.addf %219, %220 : vector<8x32xf32>
    %222 = math.tanh %221 : vector<8x32xf32>
    %223 = arith.mulf %216, %222 : vector<8x32xf32>
    %224 = vector.extract_strided_slice %167 {offsets = [24, 0], sizes = [8, 128], strides = [1, 1]} : vector<64x128xf32> to vector<8x128xf32>
    %cst_51 = arith.constant dense<0.000000e+00> : vector<8x128xf32>
    %225 = tpu.matmul %223, %163, %cst_51 {dimension_numbers = #tpu.dot_dimension_numbers<[1], [0], [0], [1], [0, 0, 1, 1], [], []>} : vector<8x32xf32>, vector<32x128xf32>, vector<8x128xf32> -> vector<8x128xf32>
    %226 = arith.addf %224, %225 : vector<8x128xf32>
    %227 = arith.negf %226 : vector<8x128xf32>
    %228 = math.exp %227 : vector<8x128xf32>
    %cst_52 = arith.constant 1.000000e+00 : f32
    %229 = vector.broadcast %cst_52 : f32 to vector<8x128xf32>
    %230 = arith.addf %229, %228 : vector<8x128xf32>
    %231 = arith.divf %229, %230 : vector<8x128xf32>
    %232 = vector.extract_strided_slice %231 {offsets = [0, 0], sizes = [8, 32], strides = [1, 1]} : vector<8x128xf32> to vector<8x32xf32>
    %233 = vector.extract_strided_slice %231 {offsets = [0, 32], sizes = [8, 32], strides = [1, 1]} : vector<8x128xf32> to vector<8x32xf32>
    %234 = vector.extract_strided_slice %231 {offsets = [0, 96], sizes = [8, 32], strides = [1, 1]} : vector<8x128xf32> to vector<8x32xf32>
    %235 = vector.extract_strided_slice %226 {offsets = [0, 64], sizes = [8, 32], strides = [1, 1]} : vector<8x128xf32> to vector<8x32xf32>
    %236 = math.tanh %235 : vector<8x32xf32>
    %237 = arith.mulf %233, %221 : vector<8x32xf32>
    %238 = arith.mulf %232, %236 : vector<8x32xf32>
    %239 = arith.addf %237, %238 : vector<8x32xf32>
    %240 = math.tanh %239 : vector<8x32xf32>
    %241 = arith.mulf %234, %240 : vector<8x32xf32>
    %242 = vector.extract_strided_slice %167 {offsets = [32, 0], sizes = [8, 128], strides = [1, 1]} : vector<64x128xf32> to vector<8x128xf32>
    %cst_53 = arith.constant dense<0.000000e+00> : vector<8x128xf32>
    %243 = tpu.matmul %241, %163, %cst_53 {dimension_numbers = #tpu.dot_dimension_numbers<[1], [0], [0], [1], [0, 0, 1, 1], [], []>} : vector<8x32xf32>, vector<32x128xf32>, vector<8x128xf32> -> vector<8x128xf32>
    %244 = arith.addf %242, %243 : vector<8x128xf32>
    %245 = arith.negf %244 : vector<8x128xf32>
    %246 = math.exp %245 : vector<8x128xf32>
    %cst_54 = arith.constant 1.000000e+00 : f32
    %247 = vector.broadcast %cst_54 : f32 to vector<8x128xf32>
    %248 = arith.addf %247, %246 : vector<8x128xf32>
    %249 = arith.divf %247, %248 : vector<8x128xf32>
    %250 = vector.extract_strided_slice %249 {offsets = [0, 0], sizes = [8, 32], strides = [1, 1]} : vector<8x128xf32> to vector<8x32xf32>
    %251 = vector.extract_strided_slice %249 {offsets = [0, 32], sizes = [8, 32], strides = [1, 1]} : vector<8x128xf32> to vector<8x32xf32>
    %252 = vector.extract_strided_slice %249 {offsets = [0, 96], sizes = [8, 32], strides = [1, 1]} : vector<8x128xf32> to vector<8x32xf32>
    %253 = vector.extract_strided_slice %244 {offsets = [0, 64], sizes = [8, 32], strides = [1, 1]} : vector<8x128xf32> to vector<8x32xf32>
    %254 = math.tanh %253 : vector<8x32xf32>
    %255 = arith.mulf %251, %239 : vector<8x32xf32>
    %256 = arith.mulf %250, %254 : vector<8x32xf32>
    %257 = arith.addf %255, %256 : vector<8x32xf32>
    %258 = math.tanh %257 : vector<8x32xf32>
    %259 = arith.mulf %252, %258 : vector<8x32xf32>
    %260 = vector.extract_strided_slice %167 {offsets = [40, 0], sizes = [8, 128], strides = [1, 1]} : vector<64x128xf32> to vector<8x128xf32>
    %cst_55 = arith.constant dense<0.000000e+00> : vector<8x128xf32>
    %261 = tpu.matmul %259, %163, %cst_55 {dimension_numbers = #tpu.dot_dimension_numbers<[1], [0], [0], [1], [0, 0, 1, 1], [], []>} : vector<8x32xf32>, vector<32x128xf32>, vector<8x128xf32> -> vector<8x128xf32>
    %262 = arith.addf %260, %261 : vector<8x128xf32>
    %263 = arith.negf %262 : vector<8x128xf32>
    %264 = math.exp %263 : vector<8x128xf32>
    %cst_56 = arith.constant 1.000000e+00 : f32
    %265 = vector.broadcast %cst_56 : f32 to vector<8x128xf32>
    %266 = arith.addf %265, %264 : vector<8x128xf32>
    %267 = arith.divf %265, %266 : vector<8x128xf32>
    %268 = vector.extract_strided_slice %267 {offsets = [0, 0], sizes = [8, 32], strides = [1, 1]} : vector<8x128xf32> to vector<8x32xf32>
    %269 = vector.extract_strided_slice %267 {offsets = [0, 32], sizes = [8, 32], strides = [1, 1]} : vector<8x128xf32> to vector<8x32xf32>
    %270 = vector.extract_strided_slice %267 {offsets = [0, 96], sizes = [8, 32], strides = [1, 1]} : vector<8x128xf32> to vector<8x32xf32>
    %271 = vector.extract_strided_slice %262 {offsets = [0, 64], sizes = [8, 32], strides = [1, 1]} : vector<8x128xf32> to vector<8x32xf32>
    %272 = math.tanh %271 : vector<8x32xf32>
    %273 = arith.mulf %269, %257 : vector<8x32xf32>
    %274 = arith.mulf %268, %272 : vector<8x32xf32>
    %275 = arith.addf %273, %274 : vector<8x32xf32>
    %276 = math.tanh %275 : vector<8x32xf32>
    %277 = arith.mulf %270, %276 : vector<8x32xf32>
    %278 = vector.extract_strided_slice %167 {offsets = [48, 0], sizes = [8, 128], strides = [1, 1]} : vector<64x128xf32> to vector<8x128xf32>
    %cst_57 = arith.constant dense<0.000000e+00> : vector<8x128xf32>
    %279 = tpu.matmul %277, %163, %cst_57 {dimension_numbers = #tpu.dot_dimension_numbers<[1], [0], [0], [1], [0, 0, 1, 1], [], []>} : vector<8x32xf32>, vector<32x128xf32>, vector<8x128xf32> -> vector<8x128xf32>
    %280 = arith.addf %278, %279 : vector<8x128xf32>
    %281 = arith.negf %280 : vector<8x128xf32>
    %282 = math.exp %281 : vector<8x128xf32>
    %cst_58 = arith.constant 1.000000e+00 : f32
    %283 = vector.broadcast %cst_58 : f32 to vector<8x128xf32>
    %284 = arith.addf %283, %282 : vector<8x128xf32>
    %285 = arith.divf %283, %284 : vector<8x128xf32>
    %286 = vector.extract_strided_slice %285 {offsets = [0, 0], sizes = [8, 32], strides = [1, 1]} : vector<8x128xf32> to vector<8x32xf32>
    %287 = vector.extract_strided_slice %285 {offsets = [0, 32], sizes = [8, 32], strides = [1, 1]} : vector<8x128xf32> to vector<8x32xf32>
    %288 = vector.extract_strided_slice %285 {offsets = [0, 96], sizes = [8, 32], strides = [1, 1]} : vector<8x128xf32> to vector<8x32xf32>
    %289 = vector.extract_strided_slice %280 {offsets = [0, 64], sizes = [8, 32], strides = [1, 1]} : vector<8x128xf32> to vector<8x32xf32>
    %290 = math.tanh %289 : vector<8x32xf32>
    %291 = arith.mulf %287, %275 : vector<8x32xf32>
    %292 = arith.mulf %286, %290 : vector<8x32xf32>
    %293 = arith.addf %291, %292 : vector<8x32xf32>
    %294 = math.tanh %293 : vector<8x32xf32>
    %295 = arith.mulf %288, %294 : vector<8x32xf32>
    %296 = vector.extract_strided_slice %167 {offsets = [56, 0], sizes = [8, 128], strides = [1, 1]} : vector<64x128xf32> to vector<8x128xf32>
    %cst_59 = arith.constant dense<0.000000e+00> : vector<8x128xf32>
    %297 = tpu.matmul %295, %163, %cst_59 {dimension_numbers = #tpu.dot_dimension_numbers<[1], [0], [0], [1], [0, 0, 1, 1], [], []>} : vector<8x32xf32>, vector<32x128xf32>, vector<8x128xf32> -> vector<8x128xf32>
    %298 = arith.addf %296, %297 : vector<8x128xf32>
    %299 = arith.negf %298 : vector<8x128xf32>
    %300 = math.exp %299 : vector<8x128xf32>
    %cst_60 = arith.constant 1.000000e+00 : f32
    %301 = vector.broadcast %cst_60 : f32 to vector<8x128xf32>
    %302 = arith.addf %301, %300 : vector<8x128xf32>
    %303 = arith.divf %301, %302 : vector<8x128xf32>
    %304 = vector.extract_strided_slice %303 {offsets = [0, 0], sizes = [8, 32], strides = [1, 1]} : vector<8x128xf32> to vector<8x32xf32>
    %305 = vector.extract_strided_slice %303 {offsets = [0, 32], sizes = [8, 32], strides = [1, 1]} : vector<8x128xf32> to vector<8x32xf32>
    %306 = vector.extract_strided_slice %303 {offsets = [0, 96], sizes = [8, 32], strides = [1, 1]} : vector<8x128xf32> to vector<8x32xf32>
    %307 = vector.extract_strided_slice %298 {offsets = [0, 64], sizes = [8, 32], strides = [1, 1]} : vector<8x128xf32> to vector<8x32xf32>
    %308 = math.tanh %307 : vector<8x32xf32>
    %309 = arith.mulf %305, %293 : vector<8x32xf32>
    %310 = arith.mulf %304, %308 : vector<8x32xf32>
    %311 = arith.addf %309, %310 : vector<8x32xf32>
    %312 = math.tanh %311 : vector<8x32xf32>
    %313 = arith.mulf %306, %312 : vector<8x32xf32>
    %c0_61 = arith.constant 0 : index
    %c0_62 = arith.constant 0 : index
    %314 = vector.load %arg8[%c0_61, %c0_62] : memref<32x4xf32, #tpu.memory_space<vmem>>, vector<32x4xf32>
    %cst_63 = arith.constant dense<0.000000e+00> : vector<8x4xf32>
    %315 = tpu.matmul %313, %314, %cst_63 {dimension_numbers = #tpu.dot_dimension_numbers<[1], [0], [0], [1], [0, 0, 1, 1], [], []>} : vector<8x32xf32>, vector<32x4xf32>, vector<8x4xf32> -> vector<8x4xf32>
    %c0_64 = arith.constant 0 : index
    %c0_65 = arith.constant 0 : index
    %316 = vector.load %arg9[%c0_64, %c0_65] : memref<1x4xf32, #tpu.memory_space<vmem>>, vector<1x4xf32>
    %317 = vector.broadcast %316 : vector<1x4xf32> to vector<8x4xf32>
    %318 = arith.addf %315, %317 : vector<8x4xf32>
    %c0_66 = arith.constant 0 : index
    %c0_67 = arith.constant 0 : index
    %319 = vector.load %arg10[%c0_66, %c0_67] : memref<8x4xf32, #tpu.memory_space<vmem>>, vector<8x4xf32>
    tpu.vector_store %arg10[%c0_66, %c0_67], %318 {strides = array<i32>} : memref<8x4xf32, #tpu.memory_space<vmem>>, vector<8x4xf32>,
    return
  }
  func.func @transform_0(%arg0: i32) -> (i32, i32) {
    %c0_i32 = arith.constant 0 : i32
    %c0_i32_0 = arith.constant 0 : i32
    %c0_i32_1 = arith.constant 0 : i32
    return %c0_i32, %c0_i32_0 : i32, i32
  }
  func.func @transform_1(%arg0: i32) -> (i32, i32) {
    %c0_i32 = arith.constant 0 : i32
    %c0_i32_0 = arith.constant 0 : i32
    %c0_i32_1 = arith.constant 0 : i32
    return %c0_i32, %c0_i32_0 : i32, i32
  }
  func.func @transform_2(%arg0: i32) -> (i32, i32) {
    %c0_i32 = arith.constant 0 : i32
    %c0_i32_0 = arith.constant 0 : i32
    %c0_i32_1 = arith.constant 0 : i32
    return %c0_i32, %c0_i32_0 : i32, i32
  }
  func.func @transform_3(%arg0: i32) -> (i32, i32) {
    %c0_i32 = arith.constant 0 : i32
    %c0_i32_0 = arith.constant 0 : i32
    %c0_i32_1 = arith.constant 0 : i32
    return %c0_i32, %c0_i32_0 : i32, i32
  }
  func.func @transform_4(%arg0: i32) -> (i32, i32) {
    %c0_i32 = arith.constant 0 : i32
    %c0_i32_0 = arith.constant 0 : i32
    %c0_i32_1 = arith.constant 0 : i32
    return %c0_i32, %c0_i32_0 : i32, i32
  }
  func.func @transform_5(%arg0: i32) -> (i32, i32) {
    %c0_i32 = arith.constant 0 : i32
    %c0_i32_0 = arith.constant 0 : i32
    %c0_i32_1 = arith.constant 0 : i32
    return %c0_i32, %c0_i32_0 : i32, i32
  }
  func.func @transform_6(%arg0: i32) -> (i32, i32) {
    %c0_i32 = arith.constant 0 : i32
    %c0_i32_0 = arith.constant 0 : i32
    %c0_i32_1 = arith.constant 0 : i32
    return %c0_i32, %c0_i32_0 : i32, i32
  }
  func.func @transform_7(%arg0: i32) -> (i32, i32) {
    %c0_i32 = arith.constant 0 : i32
    %c0_i32_0 = arith.constant 0 : i32
    %c0_i32_1 = arith.constant 0 : i32
    return %c0_i32, %c0_i32_0 : i32, i32
  }
  func.func @transform_8(%arg0: i32) -> (i32, i32) {
    %c0_i32 = arith.constant 0 : i32
    %c0_i32_0 = arith.constant 0 : i32
    %c0_i32_1 = arith.constant 0 : i32
    return %c0_i32, %c0_i32_0 : i32, i32
  }
  func.func @transform_9(%arg0: i32) -> (i32, i32) {
    %c0_i32 = arith.constant 0 : i32
    %c0_i32_0 = arith.constant 0 : i32
    %c0_i32_1 = arith.constant 0 : i32
    return %c0_i32, %c0_i32_0 : i32, i32
  }
}

</mosaic_0001>

<llo_original>
// kernel: tpu_custom_call.1
$region0: #{tpu_custom_call.1}
  #allocation0 [shape = 'u32[]', space=smem, size = 0x4, offset = 0x4, fixed_abs, tag = 'smem constant byte address 0x4 - core index']
  #allocation1 [shape = 'u32[144,128]{1,0:T(1,128)}', space=vmem, size = 0x12000, scoped, tag = 'internal scratch']
  #allocation2 [shape = 'f32[64,32]{1,0:T(8,128)}', space=vmem, size = 0x8000, scoped, tag = 'scratch operand']
  %s0 = inlined_call_operand.vmem [shape: f32[64,4], index: 0, kind: input, shape index: {}]
  %s1 = inlined_call_operand.vmem [shape: f32[4,128], index: 1, kind: input, shape index: {}]
  %s2 = inlined_call_operand.vmem [shape: f32[32,128], index: 2, kind: input, shape index: {}]
  %s3 = inlined_call_operand.vmem [shape: f32[1,128], index: 3, kind: input, shape index: {}]
  %s4 = inlined_call_operand.vmem [shape: f32[32,128], index: 4, kind: input, shape index: {}]
  %s5 = inlined_call_operand.vmem [shape: f32[32,128], index: 5, kind: input, shape index: {}]
  %s6 = inlined_call_operand.vmem [shape: f32[1,128], index: 6, kind: input, shape index: {}]
  %s7 = inlined_call_operand.vmem [shape: f32[32,4], index: 7, kind: input, shape index: {}]
  %s8 = inlined_call_operand.vmem [shape: f32[1,4], index: 8, kind: input, shape index: {}]
  %s9 = inlined_call_operand.vmem [shape: f32[8,4], index: 9, kind: output, shape index: {}]
  %s10 = sld [smem:[#allocation0]]
  $region46: #{tpu_custom_call.1} parent=0
    _
  %s12 = ssub.s32 1, %s10
  %s13 = scalar_select 0, %s12, %s10
  // Predicated region
  $region2: #{tpu_custom_call.1} parent=0 // pred_check
    _
  $region3: #{tpu_custom_call.1} parent=0 // pred_check_branch
    %15 = sbr.rel (0) target = $region5
  $region4: #{tpu_custom_call.1} parent=0 // pred_region
    _
  $region5: #{tpu_custom_call.1} parent=0 // pred_fallthru
    _
  // Predicated region
  $region6: #{tpu_custom_call.1} parent=0 // pred_check
    _
  $region7: #{tpu_custom_call.1} parent=0 // pred_check_branch
    %17 = sbr.rel (0) target = $region9
  $region8: #{tpu_custom_call.1} parent=0 // pred_region
    _
  $region9: #{tpu_custom_call.1} parent=0 // pred_fallthru
    _
  // Predicated region
  $region10: #{tpu_custom_call.1} parent=0 // pred_check
    _
  $region11: #{tpu_custom_call.1} parent=0 // pred_check_branch
    %19 = sbr.rel (0) target = $region13
  $region12: #{tpu_custom_call.1} parent=0 // pred_region
    _
  $region13: #{tpu_custom_call.1} parent=0 // pred_fallthru
    _
  // Predicated region
  $region14: #{tpu_custom_call.1} parent=0 // pred_check
    _
  $region15: #{tpu_custom_call.1} parent=0 // pred_check_branch
    %21 = sbr.rel (0) target = $region17
  $region16: #{tpu_custom_call.1} parent=0 // pred_region
    _
  $region17: #{tpu_custom_call.1} parent=0 // pred_fallthru
    _
  // Predicated region
  $region18: #{tpu_custom_call.1} parent=0 // pred_check
    _
  $region19: #{tpu_custom_call.1} parent=0 // pred_check_branch
    %23 = sbr.rel (0) target = $region21
  $region20: #{tpu_custom_call.1} parent=0 // pred_region
    _
  $region21: #{tpu_custom_call.1} parent=0 // pred_fallthru
    _
  // Predicated region
  $region22: #{tpu_custom_call.1} parent=0 // pred_check
    _
  $region23: #{tpu_custom_call.1} parent=0 // pred_check_branch
    %25 = sbr.rel (0) target = $region25
  $region24: #{tpu_custom_call.1} parent=0 // pred_region
    _
  $region25: #{tpu_custom_call.1} parent=0 // pred_fallthru
    _
  // Predicated region
  $region26: #{tpu_custom_call.1} parent=0 // pred_check
    _
  $region27: #{tpu_custom_call.1} parent=0 // pred_check_branch
    %27 = sbr.rel (0) target = $region29
  $region28: #{tpu_custom_call.1} parent=0 // pred_region
    _
  $region29: #{tpu_custom_call.1} parent=0 // pred_fallthru
    _
  // Predicated region
  $region30: #{tpu_custom_call.1} parent=0 // pred_check
    _
  $region31: #{tpu_custom_call.1} parent=0 // pred_check_branch
    %29 = sbr.rel (0) target = $region33
  $region32: #{tpu_custom_call.1} parent=0 // pred_region
    _
  $region33: #{tpu_custom_call.1} parent=0 // pred_fallthru
    _
  // Predicated region
  $region34: #{tpu_custom_call.1} parent=0 // pred_check
    _
  $region35: #{tpu_custom_call.1} parent=0 // pred_check_branch
    %31 = sbr.rel (0) target = $region37
  $region36: #{tpu_custom_call.1} parent=0 // pred_region
    _
  $region37: #{tpu_custom_call.1} parent=0 // pred_fallthru
    _
  %v32 = vld [vmem:[%s0] sm:$0xff]
  %v33 = vld [vmem:[%s0 + $0x8] sm:$0xff]
  %v34 = vld [vmem:[%s0 + $0x10] sm:$0xff]
  %v35 = vld [vmem:[%s0 + $0x18] sm:$0xff]
  %v36 = vld [vmem:[%s0 + $0x20] sm:$0xff]
  %v37 = vld [vmem:[%s0 + $0x28] sm:$0xff]
  %v38 = vld [vmem:[%s0 + $0x30] sm:$0xff]
  %v39 = vld [vmem:[%s0 + $0x38] sm:$0xff]
  %v40 = vld [vmem:[%s1] sm:$0xf]
  %v41 = vld [vmem:[%s2] sm:$0xff]
  %v42 = vld [vmem:[%s2 + $0x8] sm:$0xff]
  %v43 = vld [vmem:[%s2 + $0x10] sm:$0xff]
  %v44 = vld [vmem:[%s2 + $0x18] sm:$0xff]
  %v45 = vld [vmem:[%s3] sm:$0x1]
  %v47 = vlaneseq
  %v48 = vshrl.u32 %v47, 7
  %v49 = vsub.s32 0, %v48
  %v50 = vrot.slane %v45, %v49
  %vm52 = vcmask 31744
  %v54 = vsel %vm52, %v32, 0
  %v57 = vsel %vm52, %v33, 0
  %v60 = vsel %vm52, %v34, 0
  %v63 = vsel %vm52, %v35, 0
  %v66 = vsel %vm52, %v36, 0
  %v69 = vsel %vm52, %v37, 0
  %v72 = vsel %vm52, %v38, 0
  %v75 = vsel %vm52, %v39, 0
  %vm77 = vcmask 1043456
  %v79 = vsel %vm77, %v40, 0
  %81 = vmatprep.subr.mxu0 0.0
  %82 = vmatpush1.msra.mxu0 %v79
  %83 = vmatprep.subr.mxu0 0.0
  %84 = vmatpush1.msra.mxu0 0.0
  %85 = vmatprep.subr.mxu0 0.0
  %86 = vmatpush1.msra.mxu0 0.0
  %87 = vmatprep.subr.mxu0 0.0
  %88 = vmatpush1.msra.mxu0 0.0
  %89 = vmatprep.subr.mxu0 0.0
  %90 = vmatpush1.msra.mxu0 0.0
  %91 = vmatprep.subr.mxu0 0.0
  %92 = vmatpush1.msra.mxu0 0.0
  %93 = vmatprep.subr.mxu0 0.0
  %94 = vmatpush1.msra.mxu0 0.0
  %95 = vmatprep.subr.mxu0 0.0
  %96 = vmatpush1.msra.mxu0 0.0
  %97 = vmatprep.subr.mxu0 0.0
  %98 = vmatpush1.msra.mxu0 0.0
  %99 = vmatprep.subr.mxu0 0.0
  %100 = vmatpush1.msra.mxu0 0.0
  %101 = vmatprep.subr.mxu0 0.0
  %102 = vmatpush1.msra.mxu0 0.0
  %103 = vmatprep.subr.mxu0 0.0
  %104 = vmatpush1.msra.mxu0 0.0
  %105 = vmatprep.subr.mxu0 0.0
  %106 = vmatpush1.msra.mxu0 0.0
  %107 = vmatprep.subr.mxu0 0.0
  %108 = vmatpush1.msra.mxu0 0.0
  %109 = vmatprep.subr.mxu0 0.0
  %110 = vmatpush1.msra.mxu0 0.0
  %111 = vmatprep.subr.mxu0 0.0
  %112 = vmatpush1.msra.mxu0 0.0
  %113 = vmatprep.subr.mxu0 0.0
  %114 = vmatpush1.msra.mxu0 0.0
  %115 = vmatprep.subr.mxu0 0.0
  %116 = vmatpush1.msra.mxu0 0.0
  %117 = vmatprep.subr.mxu0 0.0
  %118 = vmatpush1.msra.mxu0 0.0
  %119 = vmatprep.subr.mxu0 0.0
  %120 = vmatpush1.msra.mxu0 0.0
  %121 = vmatprep.subr.mxu0 0.0
  %122 = vmatpush1.msra.mxu0 0.0
  %123 = vmatprep.subr.mxu0 0.0
  %124 = vmatpush1.msra.mxu0 0.0
  %125 = vmatprep.subr.mxu0 0.0
  %126 = vmatpush1.msra.mxu0 0.0
  %127 = vmatprep.subr.mxu0 0.0
  %128 = vmatpush1.msra.mxu0 0.0
  %129 = vmatprep.subr.mxu0 0.0
  %130 = vmatpush1.msra.mxu0 0.0
  %131 = vmatprep.subr.mxu0 0.0
  %132 = vmatpush1.msra.mxu0 0.0
  %133 = vmatprep.subr.mxu0 0.0
  %134 = vmatpush1.msra.mxu0 0.0
  %135 = vmatprep.subr.mxu0 0.0
  %136 = vmatpush1.msra.mxu0 0.0
  %137 = vmatprep.subr.mxu0 0.0
  %138 = vmatpush1.msra.mxu0 0.0
  %139 = vmatprep.subr.mxu0 0.0
  %140 = vmatpush1.msra.mxu0 0.0
  %141 = vmatprep.subr.mxu0 0.0
  %142 = vmatpush1.msra.mxu0 0.0
  %143 = vmatprep.subr.mxu0 0.0
  %144 = vmatpush1.msra.mxu0 0.0
  %145 = vmatprep.mubr.f32.mxu0 0.0
  %146 = vmatmul.mubr.f32.gmra.mrb[0].mxu0 %v54
  %v147 = vpop.f32.mrb[0].mxu0
  %v148 = vadd.f32 %v50, %v147
  %v149 = vpop.f32.mrb[0].mxu0
  %150 = vmatprep.mubr.f32.mxu0 0.0
  %151 = vmatmul.mubr.f32.gmra.mrb[0].mxu0 %v57
  %v152 = vpop.f32.mrb[0].mxu0
  %v153 = vadd.f32 %v50, %v152
  %v154 = vpop.f32.mrb[0].mxu0
  %155 = vmatprep.mubr.f32.mxu0 0.0
  %156 = vmatmul.mubr.f32.gmra.mrb[0].mxu0 %v60
  %v157 = vpop.f32.mrb[0].mxu0
  %v158 = vadd.f32 %v50, %v157
  %v159 = vpop.f32.mrb[0].mxu0
  %160 = vmatprep.mubr.f32.mxu0 0.0
  %161 = vmatmul.mubr.f32.gmra.mrb[0].mxu0 %v63
  %v162 = vpop.f32.mrb[0].mxu0
  %v163 = vadd.f32 %v50, %v162
  %v164 = vpop.f32.mrb[0].mxu0
  %165 = vmatprep.mubr.f32.mxu0 0.0
  %166 = vmatmul.mubr.f32.gmra.mrb[0].mxu0 %v66
  %v167 = vpop.f32.mrb[0].mxu0
  %v168 = vadd.f32 %v50, %v167
  %v169 = vpop.f32.mrb[0].mxu0
  %170 = vmatprep.mubr.f32.mxu0 0.0
  %171 = vmatmul.mubr.f32.gmra.mrb[0].mxu0 %v69
  %v172 = vpop.f32.mrb[0].mxu0
  %v173 = vadd.f32 %v50, %v172
  %v174 = vpop.f32.mrb[0].mxu0
  %175 = vmatprep.mubr.f32.mxu0 0.0
  %176 = vmatmul.mubr.f32.gmra.mrb[0].mxu0 %v72
  %v177 = vpop.f32.mrb[0].mxu0
  %v178 = vadd.f32 %v50, %v177
  %v179 = vpop.f32.mrb[0].mxu0
  %180 = vmatprep.mubr.f32.mxu0 0.0
  %181 = vmatmul.mubr.f32.gmra.mrb[0].mxu0 %v75
  %v182 = vpop.f32.mrb[0].mxu0
  %v183 = vadd.f32 %v50, %v182
  %v184 = vpop.f32.mrb[0].mxu0
  %185 = vdwg.mxu0
  %vm186 = vcmask 261120
  %v188 = vsel %vm186, 0.0, 0
  %190 = vmatprep.subr.mxu0 0.0
  %191 = vmatpush1.msra.mxu0 %v41
  %192 = vmatprep.subr.mxu0 0.0
  %193 = vmatpush1.msra.mxu0 %v42
  %194 = vmatprep.subr.mxu0 0.0
  %195 = vmatpush1.msra.mxu0 %v43
  %196 = vmatprep.subr.mxu0 0.0
  %197 = vmatpush1.msra.mxu0 %v44
  %198 = vmatprep.subr.mxu0 0.0
  %199 = vmatpush1.msra.mxu0 0.0
  %200 = vmatprep.subr.mxu0 0.0
  %201 = vmatpush1.msra.mxu0 0.0
  %202 = vmatprep.subr.mxu0 0.0
  %203 = vmatpush1.msra.mxu0 0.0
  %204 = vmatprep.subr.mxu0 0.0
  %205 = vmatpush1.msra.mxu0 0.0
  %206 = vmatprep.subr.mxu0 0.0
  %207 = vmatpush1.msra.mxu0 0.0
  %208 = vmatprep.subr.mxu0 0.0
  %209 = vmatpush1.msra.mxu0 0.0
  %210 = vmatprep.subr.mxu0 0.0
  %211 = vmatpush1.msra.mxu0 0.0
  %212 = vmatprep.subr.mxu0 0.0
  %213 = vmatpush1.msra.mxu0 0.0
  %214 = vmatprep.subr.mxu0 0.0
  %215 = vmatpush1.msra.mxu0 0.0
  %216 = vmatprep.subr.mxu0 0.0
  %217 = vmatpush1.msra.mxu0 0.0
  %218 = vmatprep.subr.mxu0 0.0
  %219 = vmatpush1.msra.mxu0 0.0
  %220 = vmatprep.subr.mxu0 0.0
  %221 = vmatpush1.msra.mxu0 0.0
  %222 = vmatprep.subr.mxu0 0.0
  %223 = vmatpush1.msra.mxu0 0.0
  %224 = vmatprep.subr.mxu0 0.0
  %225 = vmatpush1.msra.mxu0 0.0
  %226 = vmatprep.subr.mxu0 0.0
  %227 = vmatpush1.msra.mxu0 0.0
  %228 = vmatprep.subr.mxu0 0.0
  %229 = vmatpush1.msra.mxu0 0.0
  %230 = vmatprep.subr.mxu0 0.0
  %231 = vmatpush1.msra.mxu0 0.0
  %232 = vmatprep.subr.mxu0 0.0
  %233 = vmatpush1.msra.mxu0 0.0
  %234 = vmatprep.subr.mxu0 0.0
  %235 = vmatpush1.msra.mxu0 0.0
  %236 = vmatprep.subr.mxu0 0.0
  %237 = vmatpush1.msra.mxu0 0.0
  %238 = vmatprep.subr.mxu0 0.0
  %239 = vmatpush1.msra.mxu0 0.0
  %240 = vmatprep.subr.mxu0 0.0
  %241 = vmatpush1.msra.mxu0 0.0
  %242 = vmatprep.subr.mxu0 0.0
  %243 = vmatpush1.msra.mxu0 0.0
  %244 = vmatprep.subr.mxu0 0.0
  %245 = vmatpush1.msra.mxu0 0.0
  %246 = vmatprep.subr.mxu0 0.0
  %247 = vmatpush1.msra.mxu0 0.0
  %248 = vmatprep.subr.mxu0 0.0
  %249 = vmatpush1.msra.mxu0 0.0
  %250 = vmatprep.subr.mxu0 0.0
  %251 = vmatpush1.msra.mxu0 0.0
  %252 = vmatprep.subr.mxu0 0.0
  %253 = vmatpush1.msra.mxu0 0.0
  %254 = vmatprep.mubr.f32.mxu0 0.0
  %255 = vmatmul.mubr.f32.gmra.mrb[0].mxu0 %v188
  %v256 = vpop.f32.mrb[0].mxu0
  %v257 = vadd.f32 0.0, %v256
  %v258 = vpop.f32.mrb[0].mxu0
  %259 = vdwg.mxu0
  %v260 = vadd.f32 %v148, %v257
  %v261 = vxor.u32 %v260, 2147483648
  %v262 = vmul.f32 %v261, 1.442695
  %v263 = vpow.pop %v262
  %v264 = vadd.f32 %v263, 1.0
  %v265 = vrcp.pop %v264
  %v266 = vmul.f32 1.0, %v265
  %v267 = vtanh.pop %v260
  %v268 = vmul.f32 %v266, 0.0
  %270 = vrot.lane.b32.xlu0 %v267, 64
  %v271 = vpop.permute.xlu0 %270
  %v273 = vmul.f32 %v266, %v271
  %275 = vrot.lane.b32.xlu0 %v273, 32
  %v276 = vpop.permute.xlu0 %275
  %v278 = vadd.f32 %v268, %v276
  %v279 = vtanh.pop %v278
  %281 = vrot.lane.b32.xlu0 %v279, 64
  %v282 = vpop.permute.xlu0 %281
  %v284 = vmul.f32 %v266, %v282
  %286 = vrot.lane.b32.xlu0 %v284, 32
  %v287 = vpop.permute.xlu0 %286
  %289 = vst.msk [vmem:[#allocation2] sm:$0xff] %vm186, %v287
  %v290 = vsel %vm186, %v287, 0
  %292 = vmatprep.subr.mxu0 0.0
  %293 = vmatpush1.msra.mxu0 %v41
  %294 = vmatprep.subr.mxu0 0.0
  %295 = vmatpush1.msra.mxu0 %v42
  %296 = vmatprep.subr.mxu0 0.0
  %297 = vmatpush1.msra.mxu0 %v43
  %298 = vmatprep.subr.mxu0 0.0
  %299 = vmatpush1.msra.mxu0 %v44
  %300 = vmatprep.subr.mxu0 0.0
  %301 = vmatpush1.msra.mxu0 0.0
  %302 = vmatprep.subr.mxu0 0.0
  %303 = vmatpush1.msra.mxu0 0.0
  %304 = vmatprep.subr.mxu0 0.0
  %305 = vmatpush1.msra.mxu0 0.0
  %306 = vmatprep.subr.mxu0 0.0
  %307 = vmatpush1.msra.mxu0 0.0
  %308 = vmatprep.subr.mxu0 0.0
  %309 = vmatpush1.msra.mxu0 0.0
  %310 = vmatprep.subr.mxu0 0.0
  %311 = vmatpush1.msra.mxu0 0.0
  %312 = vmatprep.subr.mxu0 0.0
  %313 = vmatpush1.msra.mxu0 0.0
  %314 = vmatprep.subr.mxu0 0.0
  %315 = vmatpush1.msra.mxu0 0.0
  %316 = vmatprep.subr.mxu0 0.0
  %317 = vmatpush1.msra.mxu0 0.0
  %318 = vmatprep.subr.mxu0 0.0
  %319 = vmatpush1.msra.mxu0 0.0
  %320 = vmatprep.subr.mxu0 0.0
  %321 = vmatpush1.msra.mxu0 0.0
  %322 = vmatprep.subr.mxu0 0.0
  %323 = vmatpush1.msra.mxu0 0.0
  %324 = vmatprep.subr.mxu0 0.0
  %325 = vmatpush1.msra.mxu0 0.0
  %326 = vmatprep.subr.mxu0 0.0
  %327 = vmatpush1.msra.mxu0 0.0
  %328 = vmatprep.subr.mxu0 0.0
  %329 = vmatpush1.msra.mxu0 0.0
  %330 = vmatprep.subr.mxu0 0.0
  %331 = vmatpush1.msra.mxu0 0.0
  %332 = vmatprep.subr.mxu0 0.0
  %333 = vmatpush1.msra.mxu0 0.0
  %334 = vmatprep.subr.mxu0 0.0
  %335 = vmatpush1.msra.mxu0 0.0
  %336 = vmatprep.subr.mxu0 0.0
  %337 = vmatpush1.msra.mxu0 0.0
  %338 = vmatprep.subr.mxu0 0.0
  %339 = vmatpush1.msra.mxu0 0.0
  %340 = vmatprep.subr.mxu0 0.0
  %341 = vmatpush1.msra.mxu0 0.0
  %342 = vmatprep.subr.mxu0 0.0
  %343 = vmatpush1.msra.mxu0 0.0
  %344 = vmatprep.subr.mxu0 0.0
  %345 = vmatpush1.msra.mxu0 0.0
  %346 = vmatprep.subr.mxu0 0.0
  %347 = vmatpush1.msra.mxu0 0.0
  %348 = vmatprep.subr.mxu0 0.0
  %349 = vmatpush1.msra.mxu0 0.0
  %350 = vmatprep.subr.mxu0 0.0
  %351 = vmatpush1.msra.mxu0 0.0
  %352 = vmatprep.subr.mxu0 0.0
  %353 = vmatpush1.msra.mxu0 0.0
  %354 = vmatprep.subr.mxu0 0.0
  %355 = vmatpush1.msra.mxu0 0.0
  %356 = vmatprep.mubr.f32.mxu0 0.0
  %357 = vmatmul.mubr.f32.gmra.mrb[0].mxu0 %v290
  %v358 = vpop.f32.mrb[0].mxu0
  %v359 = vadd.f32 0.0, %v358
  %v360 = vpop.f32.mrb[0].mxu0
  %361 = vdwg.mxu0
  %v362 = vadd.f32 %v153, %v359
  %v363 = vxor.u32 %v362, 2147483648
  %v364 = vmul.f32 %v363, 1.442695
  %v365 = vpow.pop %v364
  %v366 = vadd.f32 %v365, 1.0
  %v367 = vrcp.pop %v366
  %v368 = vmul.f32 1.0, %v367
  %v369 = vtanh.pop %v362
  %v370 = vmul.f32 %v368, %v278
  %372 = vrot.lane.b32.xlu0 %v369, 64
  %v373 = vpop.permute.xlu0 %372
  %v375 = vmul.f32 %v368, %v373
  %377 = vrot.lane.b32.xlu0 %v375, 32
  %v378 = vpop.permute.xlu0 %377
  %v380 = vadd.f32 %v370, %v378
  %v381 = vtanh.pop %v380
  %383 = vrot.lane.b32.xlu0 %v381, 64
  %v384 = vpop.permute.xlu0 %383
  %v386 = vmul.f32 %v368, %v384
  %388 = vrot.lane.b32.xlu0 %v386, 32
  %v389 = vpop.permute.xlu0 %388
  %391 = vst.msk [vmem:[#allocation2 + $0x8] sm:$0xff] %vm186, %v389
  %v392 = vsel %vm186, %v389, 0
  %394 = vmatprep.subr.mxu0 0.0
  %395 = vmatpush1.msra.mxu0 %v41
  %396 = vmatprep.subr.mxu0 0.0
  %397 = vmatpush1.msra.mxu0 %v42
  %398 = vmatprep.subr.mxu0 0.0
  %399 = vmatpush1.msra.mxu0 %v43
  %400 = vmatprep.subr.mxu0 0.0
  %401 = vmatpush1.msra.mxu0 %v44
  %402 = vmatprep.subr.mxu0 0.0
  %403 = vmatpush1.msra.mxu0 0.0
  %404 = vmatprep.subr.mxu0 0.0
  %405 = vmatpush1.msra.mxu0 0.0
  %406 = vmatprep.subr.mxu0 0.0
  %407 = vmatpush1.msra.mxu0 0.0
  %408 = vmatprep.subr.mxu0 0.0
  %409 = vmatpush1.msra.mxu0 0.0
  %410 = vmatprep.subr.mxu0 0.0
  %411 = vmatpush1.msra.mxu0 0.0
  %412 = vmatprep.subr.mxu0 0.0
  %413 = vmatpush1.msra.mxu0 0.0
  %414 = vmatprep.subr.mxu0 0.0
  %415 = vmatpush1.msra.mxu0 0.0
  %416 = vmatprep.subr.mxu0 0.0
  %417 = vmatpush1.msra.mxu0 0.0
  %418 = vmatprep.subr.mxu0 0.0
  %419 = vmatpush1.msra.mxu0 0.0
  %420 = vmatprep.subr.mxu0 0.0
  %421 = vmatpush1.msra.mxu0 0.0
  %422 = vmatprep.subr.mxu0 0.0
  %423 = vmatpush1.msra.mxu0 0.0
  %424 = vmatprep.subr.mxu0 0.0
  %425 = vmatpush1.msra.mxu0 0.0
  %426 = vmatprep.subr.mxu0 0.0
  %427 = vmatpush1.msra.mxu0 0.0
  %428 = vmatprep.subr.mxu0 0.0
  %429 = vmatpush1.msra.mxu0 0.0
  %430 = vmatprep.subr.mxu0 0.0
  %431 = vmatpush1.msra.mxu0 0.0
  %432 = vmatprep.subr.mxu0 0.0
  %433 = vmatpush1.msra.mxu0 0.0
  %434 = vmatprep.subr.mxu0 0.0
  %435 = vmatpush1.msra.mxu0 0.0
  %436 = vmatprep.subr.mxu0 0.0
  %437 = vmatpush1.msra.mxu0 0.0
  %438 = vmatprep.subr.mxu0 0.0
  %439 = vmatpush1.msra.mxu0 0.0
  %440 = vmatprep.subr.mxu0 0.0
  %441 = vmatpush1.msra.mxu0 0.0
  %442 = vmatprep.subr.mxu0 0.0
  %443 = vmatpush1.msra.mxu0 0.0
  %444 = vmatprep.subr.mxu0 0.0
  %445 = vmatpush1.msra.mxu0 0.0
  %446 = vmatprep.subr.mxu0 0.0
  %447 = vmatpush1.msra.mxu0 0.0
  %448 = vmatprep.subr.mxu0 0.0
  %449 = vmatpush1.msra.mxu0 0.0
  %450 = vmatprep.subr.mxu0 0.0
  %451 = vmatpush1.msra.mxu0 0.0
  %452 = vmatprep.subr.mxu0 0.0
  %453 = vmatpush1.msra.mxu0 0.0
  %454 = vmatprep.subr.mxu0 0.0
  %455 = vmatpush1.msra.mxu0 0.0
  %456 = vmatprep.subr.mxu0 0.0
  %457 = vmatpush1.msra.mxu0 0.0
  %458 = vmatprep.mubr.f32.mxu0 0.0
  %459 = vmatmul.mubr.f32.gmra.mrb[0].mxu0 %v392
  %v460 = vpop.f32.mrb[0].mxu0
  %v461 = vadd.f32 0.0, %v460
  %v462 = vpop.f32.mrb[0].mxu0
  %463 = vdwg.mxu0
  %v464 = vadd.f32 %v158, %v461
  %v465 = vxor.u32 %v464, 2147483648
  %v466 = vmul.f32 %v465, 1.442695
  %v467 = vpow.pop %v466
  %v468 = vadd.f32 %v467, 1.0
  %v469 = vrcp.pop %v468
  %v470 = vmul.f32 1.0, %v469
  %v471 = vtanh.pop %v464
  %v472 = vmul.f32 %v470, %v380
  %474 = vrot.lane.b32.xlu0 %v471, 64
  %v475 = vpop.permute.xlu0 %474
  %v477 = vmul.f32 %v470, %v475
  %479 = vrot.lane.b32.xlu0 %v477, 32
  %v480 = vpop.permute.xlu0 %479
  %v482 = vadd.f32 %v472, %v480
  %v483 = vtanh.pop %v482
  %485 = vrot.lane.b32.xlu0 %v483, 64
  %v486 = vpop.permute.xlu0 %485
  %v488 = vmul.f32 %v470, %v486
  %490 = vrot.lane.b32.xlu0 %v488, 32
  %v491 = vpop.permute.xlu0 %490
  %493 = vst.msk [vmem:[#allocation2 + $0x10] sm:$0xff] %vm186, %v491
  %v494 = vsel %vm186, %v491, 0
  %496 = vmatprep.subr.mxu0 0.0
  %497 = vmatpush1.msra.mxu0 %v41
  %498 = vmatprep.subr.mxu0 0.0
  %499 = vmatpush1.msra.mxu0 %v42
  %500 = vmatprep.subr.mxu0 0.0
  %501 = vmatpush1.msra.mxu0 %v43
  %502 = vmatprep.subr.mxu0 0.0
  %503 = vmatpush1.msra.mxu0 %v44
  %504 = vmatprep.subr.mxu0 0.0
  %505 = vmatpush1.msra.mxu0 0.0
  %506 = vmatprep.subr.mxu0 0.0
  %507 = vmatpush1.msra.mxu0 0.0
  %508 = vmatprep.subr.mxu0 0.0
  %509 = vmatpush1.msra.mxu0 0.0
  %510 = vmatprep.subr.mxu0 0.0
  %511 = vmatpush1.msra.mxu0 0.0
  %512 = vmatprep.subr.mxu0 0.0
  %513 = vmatpush1.msra.mxu0 0.0
  %514 = vmatprep.subr.mxu0 0.0
  %515 = vmatpush1.msra.mxu0 0.0
  %516 = vmatprep.subr.mxu0 0.0
  %517 = vmatpush1.msra.mxu0 0.0
  %518 = vmatprep.subr.mxu0 0.0
  %519 = vmatpush1.msra.mxu0 0.0
  %520 = vmatprep.subr.mxu0 0.0
  %521 = vmatpush1.msra.mxu0 0.0
  %522 = vmatprep.subr.mxu0 0.0
  %523 = vmatpush1.msra.mxu0 0.0
  %524 = vmatprep.subr.mxu0 0.0
  %525 = vmatpush1.msra.mxu0 0.0
  %526 = vmatprep.subr.mxu0 0.0
  %527 = vmatpush1.msra.mxu0 0.0
  %528 = vmatprep.subr.mxu0 0.0
  %529 = vmatpush1.msra.mxu0 0.0
  %530 = vmatprep.subr.mxu0 0.0
  %531 = vmatpush1.msra.mxu0 0.0
  %532 = vmatprep.subr.mxu0 0.0
  %533 = vmatpush1.msra.mxu0 0.0
  %534 = vmatprep.subr.mxu0 0.0
  %535 = vmatpush1.msra.mxu0 0.0
  %536 = vmatprep.subr.mxu0 0.0
  %537 = vmatpush1.msra.mxu0 0.0
  %538 = vmatprep.subr.mxu0 0.0
  %539 = vmatpush1.msra.mxu0 0.0
  %540 = vmatprep.subr.mxu0 0.0
  %541 = vmatpush1.msra.mxu0 0.0
  %542 = vmatprep.subr.mxu0 0.0
  %543 = vmatpush1.msra.mxu0 0.0
  %544 = vmatprep.subr.mxu0 0.0
  %545 = vmatpush1.msra.mxu0 0.0
  %546 = vmatprep.subr.mxu0 0.0
  %547 = vmatpush1.msra.mxu0 0.0
  %548 = vmatprep.subr.mxu0 0.0
  %549 = vmatpush1.msra.mxu0 0.0
  %550 = vmatprep.subr.mxu0 0.0
  %551 = vmatpush1.msra.mxu0 0.0
  %552 = vmatprep.subr.mxu0 0.0
  %553 = vmatpush1.msra.mxu0 0.0
  %554 = vmatprep.subr.mxu0 0.0
  %555 = vmatpush1.msra.mxu0 0.0
  %556 = vmatprep.subr.mxu0 0.0
  %557 = vmatpush1.msra.mxu0 0.0
  %558 = vmatprep.subr.mxu0 0.0
  %559 = vmatpush1.msra.mxu0 0.0
  %560 = vmatprep.mubr.f32.mxu0 0.0
  %561 = vmatmul.mubr.f32.gmra.mrb[0].mxu0 %v494
  %v562 = vpop.f32.mrb[0].mxu0
  %v563 = vadd.f32 0.0, %v562
  %v564 = vpop.f32.mrb[0].mxu0
  %565 = vdwg.mxu0
  %v566 = vadd.f32 %v163, %v563
  %v567 = vxor.u32 %v566, 2147483648
  %v568 = vmul.f32 %v567, 1.442695
  %v569 = vpow.pop %v568
  %v570 = vadd.f32 %v569, 1.0
  %v571 = vrcp.pop %v570
  %v572 = vmul.f32 1.0, %v571
  %v573 = vtanh.pop %v566
  %v574 = vmul.f32 %v572, %v482
  %576 = vrot.lane.b32.xlu0 %v573, 64
  %v577 = vpop.permute.xlu0 %576
  %v579 = vmul.f32 %v572, %v577
  %581 = vrot.lane.b32.xlu0 %v579, 32
  %v582 = vpop.permute.xlu0 %581
  %v584 = vadd.f32 %v574, %v582
  %v585 = vtanh.pop %v584
  %587 = vrot.lane.b32.xlu0 %v585, 64
  %v588 = vpop.permute.xlu0 %587
  %v590 = vmul.f32 %v572, %v588
  %592 = vrot.lane.b32.xlu0 %v590, 32
  %v593 = vpop.permute.xlu0 %592
  %595 = vst.msk [vmem:[#allocation2 + $0x18] sm:$0xff] %vm186, %v593
  %v596 = vsel %vm186, %v593, 0
  %598 = vmatprep.subr.mxu0 0.0
  %599 = vmatpush1.msra.mxu0 %v41
  %600 = vmatprep.subr.mxu0 0.0
  %601 = vmatpush1.msra.mxu0 %v42
  %602 = vmatprep.subr.mxu0 0.0
  %603 = vmatpush1.msra.mxu0 %v43
  %604 = vmatprep.subr.mxu0 0.0
  %605 = vmatpush1.msra.mxu0 %v44
  %606 = vmatprep.subr.mxu0 0.0
  %607 = vmatpush1.msra.mxu0 0.0
  %608 = vmatprep.subr.mxu0 0.0
  %609 = vmatpush1.msra.mxu0 0.0
  %610 = vmatprep.subr.mxu0 0.0
  %611 = vmatpush1.msra.mxu0 0.0
  %612 = vmatprep.subr.mxu0 0.0
  %613 = vmatpush1.msra.mxu0 0.0
  %614 = vmatprep.subr.mxu0 0.0
  %615 = vmatpush1.msra.mxu0 0.0
  %616 = vmatprep.subr.mxu0 0.0
  %617 = vmatpush1.msra.mxu0 0.0
  %618 = vmatprep.subr.mxu0 0.0
  %619 = vmatpush1.msra.mxu0 0.0
  %620 = vmatprep.subr.mxu0 0.0
  %621 = vmatpush1.msra.mxu0 0.0
  %622 = vmatprep.subr.mxu0 0.0
  %623 = vmatpush1.msra.mxu0 0.0
  %624 = vmatprep.subr.mxu0 0.0
  %625 = vmatpush1.msra.mxu0 0.0
  %626 = vmatprep.subr.mxu0 0.0
  %627 = vmatpush1.msra.mxu0 0.0
  %628 = vmatprep.subr.mxu0 0.0
  %629 = vmatpush1.msra.mxu0 0.0
  %630 = vmatprep.subr.mxu0 0.0
  %631 = vmatpush1.msra.mxu0 0.0
  %632 = vmatprep.subr.mxu0 0.0
  %633 = vmatpush1.msra.mxu0 0.0
  %634 = vmatprep.subr.mxu0 0.0
  %635 = vmatpush1.msra.mxu0 0.0
  %636 = vmatprep.subr.mxu0 0.0
  %637 = vmatpush1.msra.mxu0 0.0
  %638 = vmatprep.subr.mxu0 0.0
  %639 = vmatpush1.msra.mxu0 0.0
  %640 = vmatprep.subr.mxu0 0.0
  %641 = vmatpush1.msra.mxu0 0.0
  %642 = vmatprep.subr.mxu0 0.0
  %643 = vmatpush1.msra.mxu0 0.0
  %644 = vmatprep.subr.mxu0 0.0
  %645 = vmatpush1.msra.mxu0 0.0
  %646 = vmatprep.subr.mxu0 0.0
  %647 = vmatpush1.msra.mxu0 0.0
  %648 = vmatprep.subr.mxu0 0.0
  %649 = vmatpush1.msra.mxu0 0.0
  %650 = vmatprep.subr.mxu0 0.0
  %651 = vmatpush1.msra.mxu0 0.0
  %652 = vmatprep.subr.mxu0 0.0
  %653 = vmatpush1.msra.mxu0 0.0
  %654 = vmatprep.subr.mxu0 0.0
  %655 = vmatpush1.msra.mxu0 0.0
  %656 = vmatprep.subr.mxu0 0.0
  %657 = vmatpush1.msra.mxu0 0.0
  %658 = vmatprep.subr.mxu0 0.0
  %659 = vmatpush1.msra.mxu0 0.0
  %660 = vmatprep.subr.mxu0 0.0
  %661 = vmatpush1.msra.mxu0 0.0
  %662 = vmatprep.mubr.f32.mxu0 0.0
  %663 = vmatmul.mubr.f32.gmra.mrb[0].mxu0 %v596
  %v664 = vpop.f32.mrb[0].mxu0
  %v665 = vadd.f32 0.0, %v664
  %v666 = vpop.f32.mrb[0].mxu0
  %667 = vdwg.mxu0
  %v668 = vadd.f32 %v168, %v665
  %v669 = vxor.u32 %v668, 2147483648
  %v670 = vmul.f32 %v669, 1.442695
  %v671 = vpow.pop %v670
  %v672 = vadd.f32 %v671, 1.0
  %v673 = vrcp.pop %v672
  %v674 = vmul.f32 1.0, %v673
  %v675 = vtanh.pop %v668
  %v676 = vmul.f32 %v674, %v584
  %678 = vrot.lane.b32.xlu0 %v675, 64
  %v679 = vpop.permute.xlu0 %678
  %v681 = vmul.f32 %v674, %v679
  %683 = vrot.lane.b32.xlu0 %v681, 32
  %v684 = vpop.permute.xlu0 %683
  %v686 = vadd.f32 %v676, %v684
  %v687 = vtanh.pop %v686
  %689 = vrot.lane.b32.xlu0 %v687, 64
  %v690 = vpop.permute.xlu0 %689
  %v692 = vmul.f32 %v674, %v690
  %694 = vrot.lane.b32.xlu0 %v692, 32
  %v695 = vpop.permute.xlu0 %694
  %697 = vst.msk [vmem:[#allocation2 + $0x20] sm:$0xff] %vm186, %v695
  %v698 = vsel %vm186, %v695, 0
  %700 = vmatprep.subr.mxu0 0.0
  %701 = vmatpush1.msra.mxu0 %v41
  %702 = vmatprep.subr.mxu0 0.0
  %703 = vmatpush1.msra.mxu0 %v42
  %704 = vmatprep.subr.mxu0 0.0
  %705 = vmatpush1.msra.mxu0 %v43
  %706 = vmatprep.subr.mxu0 0.0
  %707 = vmatpush1.msra.mxu0 %v44
  %708 = vmatprep.subr.mxu0 0.0
  %709 = vmatpush1.msra.mxu0 0.0
  %710 = vmatprep.subr.mxu0 0.0
  %711 = vmatpush1.msra.mxu0 0.0
  %712 = vmatprep.subr.mxu0 0.0
  %713 = vmatpush1.msra.mxu0 0.0
  %714 = vmatprep.subr.mxu0 0.0
  %715 = vmatpush1.msra.mxu0 0.0
  %716 = vmatprep.subr.mxu0 0.0
  %717 = vmatpush1.msra.mxu0 0.0
  %718 = vmatprep.subr.mxu0 0.0
  %719 = vmatpush1.msra.mxu0 0.0
  %720 = vmatprep.subr.mxu0 0.0
  %721 = vmatpush1.msra.mxu0 0.0
  %722 = vmatprep.subr.mxu0 0.0
  %723 = vmatpush1.msra.mxu0 0.0
  %724 = vmatprep.subr.mxu0 0.0
  %725 = vmatpush1.msra.mxu0 0.0
  %726 = vmatprep.subr.mxu0 0.0
  %727 = vmatpush1.msra.mxu0 0.0
  %728 = vmatprep.subr.mxu0 0.0
  %729 = vmatpush1.msra.mxu0 0.0
  %730 = vmatprep.subr.mxu0 0.0
  %731 = vmatpush1.msra.mxu0 0.0
  %732 = vmatprep.subr.mxu0 0.0
  %733 = vmatpush1.msra.mxu0 0.0
  %734 = vmatprep.subr.mxu0 0.0
  %735 = vmatpush1.msra.mxu0 0.0
  %736 = vmatprep.subr.mxu0 0.0
  %737 = vmatpush1.msra.mxu0 0.0
  %738 = vmatprep.subr.mxu0 0.0
  %739 = vmatpush1.msra.mxu0 0.0
  %740 = vmatprep.subr.mxu0 0.0
  %741 = vmatpush1.msra.mxu0 0.0
  %742 = vmatprep.subr.mxu0 0.0
  %743 = vmatpush1.msra.mxu0 0.0
  %744 = vmatprep.subr.mxu0 0.0
  %745 = vmatpush1.msra.mxu0 0.0
  %746 = vmatprep.subr.mxu0 0.0
  %747 = vmatpush1.msra.mxu0 0.0
  %748 = vmatprep.subr.mxu0 0.0
  %749 = vmatpush1.msra.mxu0 0.0
  %750 = vmatprep.subr.mxu0 0.0
  %751 = vmatpush1.msra.mxu0 0.0
  %752 = vmatprep.subr.mxu0 0.0
  %753 = vmatpush1.msra.mxu0 0.0
  %754 = vmatprep.subr.mxu0 0.0
  %755 = vmatpush1.msra.mxu0 0.0
  %756 = vmatprep.subr.mxu0 0.0
  %757 = vmatpush1.msra.mxu0 0.0
  %758 = vmatprep.subr.mxu0 0.0
  %759 = vmatpush1.msra.mxu0 0.0
  %760 = vmatprep.subr.mxu0 0.0
  %761 = vmatpush1.msra.mxu0 0.0
  %762 = vmatprep.subr.mxu0 0.0
  %763 = vmatpush1.msra.mxu0 0.0
  %764 = vmatprep.mubr.f32.mxu0 0.0
  %765 = vmatmul.mubr.f32.gmra.mrb[0].mxu0 %v698
  %v766 = vpop.f32.mrb[0].mxu0
  %v767 = vadd.f32 0.0, %v766
  %v768 = vpop.f32.mrb[0].mxu0
  %769 = vdwg.mxu0
  %v770 = vadd.f32 %v173, %v767
  %v771 = vxor.u32 %v770, 2147483648
  %v772 = vmul.f32 %v771, 1.442695
  %v773 = vpow.pop %v772
  %v774 = vadd.f32 %v773, 1.0
  %v775 = vrcp.pop %v774
  %v776 = vmul.f32 1.0, %v775
  %v777 = vtanh.pop %v770
  %v778 = vmul.f32 %v776, %v686
  %780 = vrot.lane.b32.xlu0 %v777, 64
  %v781 = vpop.permute.xlu0 %780
  %v783 = vmul.f32 %v776, %v781
  %785 = vrot.lane.b32.xlu0 %v783, 32
  %v786 = vpop.permute.xlu0 %785
  %v788 = vadd.f32 %v778, %v786
  %v789 = vtanh.pop %v788
  %791 = vrot.lane.b32.xlu0 %v789, 64
  %v792 = vpop.permute.xlu0 %791
  %v794 = vmul.f32 %v776, %v792
  %796 = vrot.lane.b32.xlu0 %v794, 32
  %v797 = vpop.permute.xlu0 %796
  %799 = vst.msk [vmem:[#allocation2 + $0x28] sm:$0xff] %vm186, %v797
  %v800 = vsel %vm186, %v797, 0
  %802 = vmatprep.subr.mxu0 0.0
  %803 = vmatpush1.msra.mxu0 %v41
  %804 = vmatprep.subr.mxu0 0.0
  %805 = vmatpush1.msra.mxu0 %v42
  %806 = vmatprep.subr.mxu0 0.0
  %807 = vmatpush1.msra.mxu0 %v43
  %808 = vmatprep.subr.mxu0 0.0
  %809 = vmatpush1.msra.mxu0 %v44
  %810 = vmatprep.subr.mxu0 0.0
  %811 = vmatpush1.msra.mxu0 0.0
  %812 = vmatprep.subr.mxu0 0.0
  %813 = vmatpush1.msra.mxu0 0.0
  %814 = vmatprep.subr.mxu0 0.0
  %815 = vmatpush1.msra.mxu0 0.0
  %816 = vmatprep.subr.mxu0 0.0
  %817 = vmatpush1.msra.mxu0 0.0
  %818 = vmatprep.subr.mxu0 0.0
  %819 = vmatpush1.msra.mxu0 0.0
  %820 = vmatprep.subr.mxu0 0.0
  %821 = vmatpush1.msra.mxu0 0.0
  %822 = vmatprep.subr.mxu0 0.0
  %823 = vmatpush1.msra.mxu0 0.0
  %824 = vmatprep.subr.mxu0 0.0
  %825 = vmatpush1.msra.mxu0 0.0
  %826 = vmatprep.subr.mxu0 0.0
  %827 = vmatpush1.msra.mxu0 0.0
  %828 = vmatprep.subr.mxu0 0.0
  %829 = vmatpush1.msra.mxu0 0.0
  %830 = vmatprep.subr.mxu0 0.0
  %831 = vmatpush1.msra.mxu0 0.0
  %832 = vmatprep.subr.mxu0 0.0
  %833 = vmatpush1.msra.mxu0 0.0
  %834 = vmatprep.subr.mxu0 0.0
  %835 = vmatpush1.msra.mxu0 0.0
  %836 = vmatprep.subr.mxu0 0.0
  %837 = vmatpush1.msra.mxu0 0.0
  %838 = vmatprep.subr.mxu0 0.0
  %839 = vmatpush1.msra.mxu0 0.0
  %840 = vmatprep.subr.mxu0 0.0
  %841 = vmatpush1.msra.mxu0 0.0
  %842 = vmatprep.subr.mxu0 0.0
  %843 = vmatpush1.msra.mxu0 0.0
  %844 = vmatprep.subr.mxu0 0.0
  %845 = vmatpush1.msra.mxu0 0.0
  %846 = vmatprep.subr.mxu0 0.0
  %847 = vmatpush1.msra.mxu0 0.0
  %848 = vmatprep.subr.mxu0 0.0
  %849 = vmatpush1.msra.mxu0 0.0
  %850 = vmatprep.subr.mxu0 0.0
  %851 = vmatpush1.msra.mxu0 0.0
  %852 = vmatprep.subr.mxu0 0.0
  %853 = vmatpush1.msra.mxu0 0.0
  %854 = vmatprep.subr.mxu0 0.0
  %855 = vmatpush1.msra.mxu0 0.0
  %856 = vmatprep.subr.mxu0 0.0
  %857 = vmatpush1.msra.mxu0 0.0
  %858 = vmatprep.subr.mxu0 0.0
  %859 = vmatpush1.msra.mxu0 0.0
  %860 = vmatprep.subr.mxu0 0.0
  %861 = vmatpush1.msra.mxu0 0.0
  %862 = vmatprep.subr.mxu0 0.0
  %863 = vmatpush1.msra.mxu0 0.0
  %864 = vmatprep.subr.mxu0 0.0
  %865 = vmatpush1.msra.mxu0 0.0
  %866 = vmatprep.mubr.f32.mxu0 0.0
  %867 = vmatmul.mubr.f32.gmra.mrb[0].mxu0 %v800
  %v868 = vpop.f32.mrb[0].mxu0
  %v869 = vadd.f32 0.0, %v868
  %v870 = vpop.f32.mrb[0].mxu0
  %871 = vdwg.mxu0
  %v872 = vadd.f32 %v178, %v869
  %v873 = vxor.u32 %v872, 2147483648
  %v874 = vmul.f32 %v873, 1.442695
  %v875 = vpow.pop %v874
  %v876 = vadd.f32 %v875, 1.0
  %v877 = vrcp.pop %v876
  %v878 = vmul.f32 1.0, %v877
  %v879 = vtanh.pop %v872
  %v880 = vmul.f32 %v878, %v788
  %882 = vrot.lane.b32.xlu0 %v879, 64
  %v883 = vpop.permute.xlu0 %882
  %v885 = vmul.f32 %v878, %v883
  %887 = vrot.lane.b32.xlu0 %v885, 32
  %v888 = vpop.permute.xlu0 %887
  %v890 = vadd.f32 %v880, %v888
  %v891 = vtanh.pop %v890
  %893 = vrot.lane.b32.xlu0 %v891, 64
  %v894 = vpop.permute.xlu0 %893
  %v896 = vmul.f32 %v878, %v894
  %898 = vrot.lane.b32.xlu0 %v896, 32
  %v899 = vpop.permute.xlu0 %898
  %901 = vst.msk [vmem:[#allocation2 + $0x30] sm:$0xff] %vm186, %v899
  %v902 = vsel %vm186, %v899, 0
  %904 = vmatprep.subr.mxu0 0.0
  %905 = vmatpush1.msra.mxu0 %v41
  %906 = vmatprep.subr.mxu0 0.0
  %907 = vmatpush1.msra.mxu0 %v42
  %908 = vmatprep.subr.mxu0 0.0
  %909 = vmatpush1.msra.mxu0 %v43
  %910 = vmatprep.subr.mxu0 0.0
  %911 = vmatpush1.msra.mxu0 %v44
  %912 = vmatprep.subr.mxu0 0.0
  %913 = vmatpush1.msra.mxu0 0.0
  %914 = vmatprep.subr.mxu0 0.0
  %915 = vmatpush1.msra.mxu0 0.0
  %916 = vmatprep.subr.mxu0 0.0
  %917 = vmatpush1.msra.mxu0 0.0
  %918 = vmatprep.subr.mxu0 0.0
  %919 = vmatpush1.msra.mxu0 0.0
  %920 = vmatprep.subr.mxu0 0.0
  %921 = vmatpush1.msra.mxu0 0.0
  %922 = vmatprep.subr.mxu0 0.0
  %923 = vmatpush1.msra.mxu0 0.0
  %924 = vmatprep.subr.mxu0 0.0
  %925 = vmatpush1.msra.mxu0 0.0
  %926 = vmatprep.subr.mxu0 0.0
  %927 = vmatpush1.msra.mxu0 0.0
  %928 = vmatprep.subr.mxu0 0.0
  %929 = vmatpush1.msra.mxu0 0.0
  %930 = vmatprep.subr.mxu0 0.0
  %931 = vmatpush1.msra.mxu0 0.0
  %932 = vmatprep.subr.mxu0 0.0
  %933 = vmatpush1.msra.mxu0 0.0
  %934 = vmatprep.subr.mxu0 0.0
  %935 = vmatpush1.msra.mxu0 0.0
  %936 = vmatprep.subr.mxu0 0.0
  %937 = vmatpush1.msra.mxu0 0.0
  %938 = vmatprep.subr.mxu0 0.0
  %939 = vmatpush1.msra.mxu0 0.0
  %940 = vmatprep.subr.mxu0 0.0
  %941 = vmatpush1.msra.mxu0 0.0
  %942 = vmatprep.subr.mxu0 0.0
  %943 = vmatpush1.msra.mxu0 0.0
  %944 = vmatprep.subr.mxu0 0.0
  %945 = vmatpush1.msra.mxu0 0.0
  %946 = vmatprep.subr.mxu0 0.0
  %947 = vmatpush1.msra.mxu0 0.0
  %948 = vmatprep.subr.mxu0 0.0
  %949 = vmatpush1.msra.mxu0 0.0
  %950 = vmatprep.subr.mxu0 0.0
  %951 = vmatpush1.msra.mxu0 0.0
  %952 = vmatprep.subr.mxu0 0.0
  %953 = vmatpush1.msra.mxu0 0.0
  %954 = vmatprep.subr.mxu0 0.0
  %955 = vmatpush1.msra.mxu0 0.0
  %956 = vmatprep.subr.mxu0 0.0
  %957 = vmatpush1.msra.mxu0 0.0
  %958 = vmatprep.subr.mxu0 0.0
  %959 = vmatpush1.msra.mxu0 0.0
  %960 = vmatprep.subr.mxu0 0.0
  %961 = vmatpush1.msra.mxu0 0.0
  %962 = vmatprep.subr.mxu0 0.0
  %963 = vmatpush1.msra.mxu0 0.0
  %964 = vmatprep.subr.mxu0 0.0
  %965 = vmatpush1.msra.mxu0 0.0
  %966 = vmatprep.subr.mxu0 0.0
  %967 = vmatpush1.msra.mxu0 0.0
  %968 = vmatprep.mubr.f32.mxu0 0.0
  %969 = vmatmul.mubr.f32.gmra.mrb[0].mxu0 %v902
  %v970 = vpop.f32.mrb[0].mxu0
  %v971 = vadd.f32 0.0, %v970
  %v972 = vpop.f32.mrb[0].mxu0
  %973 = vdwg.mxu0
  %v974 = vadd.f32 %v183, %v971
  %v975 = vxor.u32 %v974, 2147483648
  %v976 = vmul.f32 %v975, 1.442695
  %v977 = vpow.pop %v976
  %v978 = vadd.f32 %v977, 1.0
  %v979 = vrcp.pop %v978
  %v980 = vmul.f32 1.0, %v979
  %v981 = vtanh.pop %v974
  %v982 = vmul.f32 %v980, %v890
  %984 = vrot.lane.b32.xlu0 %v981, 64
  %v985 = vpop.permute.xlu0 %984
  %v987 = vmul.f32 %v980, %v985
  %989 = vrot.lane.b32.xlu0 %v987, 32
  %v990 = vpop.permute.xlu0 %989
  %v992 = vadd.f32 %v982, %v990
  %v993 = vtanh.pop %v992
  %995 = vrot.lane.b32.xlu0 %v993, 64
  %v996 = vpop.permute.xlu0 %995
  %v998 = vmul.f32 %v980, %v996
  %1000 = vrot.lane.b32.xlu0 %v998, 32
  %v1001 = vpop.permute.xlu0 %1000
  %1003 = vst.msk [vmem:[#allocation2 + $0x38] sm:$0xff] %vm186, %v1001
  %v1004 = vld [vmem:[#allocation2] sm:$0xff]
  %v1005 = vld [vmem:[#allocation2 + $0x8] sm:$0xff]
  %v1006 = vld [vmem:[#allocation2 + $0x10] sm:$0xff]
  %v1007 = vld [vmem:[#allocation2 + $0x18] sm:$0xff]
  %v1008 = vld [vmem:[#allocation2 + $0x20] sm:$0xff]
  %v1009 = vld [vmem:[#allocation2 + $0x28] sm:$0xff]
  %v1010 = vld [vmem:[#allocation2 + $0x30] sm:$0xff]
  %v1011 = vld [vmem:[#allocation2 + $0x38] sm:$0xff]
  %v1012 = vld [vmem:[%s4] sm:$0xff]
  %v1013 = vld [vmem:[%s4 + $0x8] sm:$0xff]
  %v1014 = vld [vmem:[%s4 + $0x10] sm:$0xff]
  %v1015 = vld [vmem:[%s4 + $0x18] sm:$0xff]
  %v1016 = vld [vmem:[%s5] sm:$0xff]
  %v1017 = vld [vmem:[%s5 + $0x8] sm:$0xff]
  %v1018 = vld [vmem:[%s5 + $0x10] sm:$0xff]
  %v1019 = vld [vmem:[%s5 + $0x18] sm:$0xff]
  %v1020 = vld [vmem:[%s6] sm:$0x1]
  %v1022 = vlaneseq
  %v1023 = vshrl.u32 %v1022, 7
  %v1024 = vsub.s32 0, %v1023
  %v1025 = vrot.slane %v1020, %v1024
  %v1028 = vsel %vm186, %v1004, 0
  %v1031 = vsel %vm186, %v1005, 0
  %v1034 = vsel %vm186, %v1006, 0
  %v1037 = vsel %vm186, %v1007, 0
  %v1040 = vsel %vm186, %v1008, 0
  %v1043 = vsel %vm186, %v1009, 0
  %v1046 = vsel %vm186, %v1010, 0
  %v1049 = vsel %vm186, %v1011, 0
  %1051 = vmatprep.subr.mxu0 0.0
  %1052 = vmatpush1.msra.mxu0 %v1012
  %1053 = vmatprep.subr.mxu0 0.0
  %1054 = vmatpush1.msra.mxu0 %v1013
  %1055 = vmatprep.subr.mxu0 0.0
  %1056 = vmatpush1.msra.mxu0 %v1014
  %1057 = vmatprep.subr.mxu0 0.0
  %1058 = vmatpush1.msra.mxu0 %v1015
  %1059 = vmatprep.subr.mxu0 0.0
  %1060 = vmatpush1.msra.mxu0 0.0
  %1061 = vmatprep.subr.mxu0 0.0
  %1062 = vmatpush1.msra.mxu0 0.0
  %1063 = vmatprep.subr.mxu0 0.0
  %1064 = vmatpush1.msra.mxu0 0.0
  %1065 = vmatprep.subr.mxu0 0.0
  %1066 = vmatpush1.msra.mxu0 0.0
  %1067 = vmatprep.subr.mxu0 0.0
  %1068 = vmatpush1.msra.mxu0 0.0
  %1069 = vmatprep.subr.mxu0 0.0
  %1070 = vmatpush1.msra.mxu0 0.0
  %1071 = vmatprep.subr.mxu0 0.0
  %1072 = vmatpush1.msra.mxu0 0.0
  %1073 = vmatprep.subr.mxu0 0.0
  %1074 = vmatpush1.msra.mxu0 0.0
  %1075 = vmatprep.subr.mxu0 0.0
  %1076 = vmatpush1.msra.mxu0 0.0
  %1077 = vmatprep.subr.mxu0 0.0
  %1078 = vmatpush1.msra.mxu0 0.0
  %1079 = vmatprep.subr.mxu0 0.0
  %1080 = vmatpush1.msra.mxu0 0.0
  %1081 = vmatprep.subr.mxu0 0.0
  %1082 = vmatpush1.msra.mxu0 0.0
  %1083 = vmatprep.subr.mxu0 0.0
  %1084 = vmatpush1.msra.mxu0 0.0
  %1085 = vmatprep.subr.mxu0 0.0
  %1086 = vmatpush1.msra.mxu0 0.0
  %1087 = vmatprep.subr.mxu0 0.0
  %1088 = vmatpush1.msra.mxu0 0.0
  %1089 = vmatprep.subr.mxu0 0.0
  %1090 = vmatpush1.msra.mxu0 0.0
  %1091 = vmatprep.subr.mxu0 0.0
  %1092 = vmatpush1.msra.mxu0 0.0
  %1093 = vmatprep.subr.mxu0 0.0
  %1094 = vmatpush1.msra.mxu0 0.0
  %1095 = vmatprep.subr.mxu0 0.0
  %1096 = vmatpush1.msra.mxu0 0.0
  %1097 = vmatprep.subr.mxu0 0.0
  %1098 = vmatpush1.msra.mxu0 0.0
  %1099 = vmatprep.subr.mxu0 0.0
  %1100 = vmatpush1.msra.mxu0 0.0
  %1101 = vmatprep.subr.mxu0 0.0
  %1102 = vmatpush1.msra.mxu0 0.0
  %1103 = vmatprep.subr.mxu0 0.0
  %1104 = vmatpush1.msra.mxu0 0.0
  %1105 = vmatprep.subr.mxu0 0.0
  %1106 = vmatpush1.msra.mxu0 0.0
  %1107 = vmatprep.subr.mxu0 0.0
  %1108 = vmatpush1.msra.mxu0 0.0
  %1109 = vmatprep.subr.mxu0 0.0
  %1110 = vmatpush1.msra.mxu0 0.0
  %1111 = vmatprep.subr.mxu0 0.0
  %1112 = vmatpush1.msra.mxu0 0.0
  %1113 = vmatprep.subr.mxu0 0.0
  %1114 = vmatpush1.msra.mxu0 0.0
  %1115 = vmatprep.mubr.f32.mxu0 0.0
  %1116 = vmatmul.mubr.f32.gmra.mrb[0].mxu0 %v1028
  %v1117 = vpop.f32.mrb[0].mxu0
  %v1118 = vadd.f32 %v1025, %v1117
  %v1119 = vpop.f32.mrb[0].mxu0
  %1120 = vmatprep.mubr.f32.mxu0 0.0
  %1121 = vmatmul.mubr.f32.gmra.mrb[0].mxu0 %v1031
  %v1122 = vpop.f32.mrb[0].mxu0
  %v1123 = vadd.f32 %v1025, %v1122
  %v1124 = vpop.f32.mrb[0].mxu0
  %1125 = vmatprep.mubr.f32.mxu0 0.0
  %1126 = vmatmul.mubr.f32.gmra.mrb[0].mxu0 %v1034
  %v1127 = vpop.f32.mrb[0].mxu0
  %v1128 = vadd.f32 %v1025, %v1127
  %v1129 = vpop.f32.mrb[0].mxu0
  %1130 = vmatprep.mubr.f32.mxu0 0.0
  %1131 = vmatmul.mubr.f32.gmra.mrb[0].mxu0 %v1037
  %v1132 = vpop.f32.mrb[0].mxu0
  %v1133 = vadd.f32 %v1025, %v1132
  %v1134 = vpop.f32.mrb[0].mxu0
  %1135 = vmatprep.mubr.f32.mxu0 0.0
  %1136 = vmatmul.mubr.f32.gmra.mrb[0].mxu0 %v1040
  %v1137 = vpop.f32.mrb[0].mxu0
  %v1138 = vadd.f32 %v1025, %v1137
  %v1139 = vpop.f32.mrb[0].mxu0
  %1140 = vmatprep.mubr.f32.mxu0 0.0
  %1141 = vmatmul.mubr.f32.gmra.mrb[0].mxu0 %v1043
  %v1142 = vpop.f32.mrb[0].mxu0
  %v1143 = vadd.f32 %v1025, %v1142
  %v1144 = vpop.f32.mrb[0].mxu0
  %1145 = vmatprep.mubr.f32.mxu0 0.0
  %1146 = vmatmul.mubr.f32.gmra.mrb[0].mxu0 %v1046
  %v1147 = vpop.f32.mrb[0].mxu0
  %v1148 = vadd.f32 %v1025, %v1147
  %v1149 = vpop.f32.mrb[0].mxu0
  %1150 = vmatprep.mubr.f32.mxu0 0.0
  %1151 = vmatmul.mubr.f32.gmra.mrb[0].mxu0 %v1049
  %v1152 = vpop.f32.mrb[0].mxu0
  %v1153 = vadd.f32 %v1025, %v1152
  %v1154 = vpop.f32.mrb[0].mxu0
  %1155 = vdwg.mxu0
  %1156 = vmatprep.subr.mxu0 0.0
  %1157 = vmatpush1.msra.mxu0 %v1016
  %1158 = vmatprep.subr.mxu0 0.0
  %1159 = vmatpush1.msra.mxu0 %v1017
  %1160 = vmatprep.subr.mxu0 0.0
  %1161 = vmatpush1.msra.mxu0 %v1018
  %1162 = vmatprep.subr.mxu0 0.0
  %1163 = vmatpush1.msra.mxu0 %v1019
  %1164 = vmatprep.subr.mxu0 0.0
  %1165 = vmatpush1.msra.mxu0 0.0
  %1166 = vmatprep.subr.mxu0 0.0
  %1167 = vmatpush1.msra.mxu0 0.0
  %1168 = vmatprep.subr.mxu0 0.0
  %1169 = vmatpush1.msra.mxu0 0.0
  %1170 = vmatprep.subr.mxu0 0.0
  %1171 = vmatpush1.msra.mxu0 0.0
  %1172 = vmatprep.subr.mxu0 0.0
  %1173 = vmatpush1.msra.mxu0 0.0
  %1174 = vmatprep.subr.mxu0 0.0
  %1175 = vmatpush1.msra.mxu0 0.0
  %1176 = vmatprep.subr.mxu0 0.0
  %1177 = vmatpush1.msra.mxu0 0.0
  %1178 = vmatprep.subr.mxu0 0.0
  %1179 = vmatpush1.msra.mxu0 0.0
  %1180 = vmatprep.subr.mxu0 0.0
  %1181 = vmatpush1.msra.mxu0 0.0
  %1182 = vmatprep.subr.mxu0 0.0
  %1183 = vmatpush1.msra.mxu0 0.0
  %1184 = vmatprep.subr.mxu0 0.0
  %1185 = vmatpush1.msra.mxu0 0.0
  %1186 = vmatprep.subr.mxu0 0.0
  %1187 = vmatpush1.msra.mxu0 0.0
  %1188 = vmatprep.subr.mxu0 0.0
  %1189 = vmatpush1.msra.mxu0 0.0
  %1190 = vmatprep.subr.mxu0 0.0
  %1191 = vmatpush1.msra.mxu0 0.0
  %1192 = vmatprep.subr.mxu0 0.0
  %1193 = vmatpush1.msra.mxu0 0.0
  %1194 = vmatprep.subr.mxu0 0.0
  %1195 = vmatpush1.msra.mxu0 0.0
  %1196 = vmatprep.subr.mxu0 0.0
  %1197 = vmatpush1.msra.mxu0 0.0
  %1198 = vmatprep.subr.mxu0 0.0
  %1199 = vmatpush1.msra.mxu0 0.0
  %1200 = vmatprep.subr.mxu0 0.0
  %1201 = vmatpush1.msra.mxu0 0.0
  %1202 = vmatprep.subr.mxu0 0.0
  %1203 = vmatpush1.msra.mxu0 0.0
  %1204 = vmatprep.subr.mxu0 0.0
  %1205 = vmatpush1.msra.mxu0 0.0
  %1206 = vmatprep.subr.mxu0 0.0
  %1207 = vmatpush1.msra.mxu0 0.0
  %1208 = vmatprep.subr.mxu0 0.0
  %1209 = vmatpush1.msra.mxu0 0.0
  %1210 = vmatprep.subr.mxu0 0.0
  %1211 = vmatpush1.msra.mxu0 0.0
  %1212 = vmatprep.subr.mxu0 0.0
  %1213 = vmatpush1.msra.mxu0 0.0
  %1214 = vmatprep.subr.mxu0 0.0
  %1215 = vmatpush1.msra.mxu0 0.0
  %1216 = vmatprep.subr.mxu0 0.0
  %1217 = vmatpush1.msra.mxu0 0.0
  %1218 = vmatprep.subr.mxu0 0.0
  %1219 = vmatpush1.msra.mxu0 0.0
  %1220 = vmatprep.mubr.f32.mxu0 0.0
  %1221 = vmatmul.mubr.f32.gmra.mrb[0].mxu0 %v188
  %v1222 = vpop.f32.mrb[0].mxu0
  %v1223 = vadd.f32 0.0, %v1222
  %v1224 = vpop.f32.mrb[0].mxu0
  %1225 = vdwg.mxu0
  %v1226 = vadd.f32 %v1118, %v1223
  %v1227 = vxor.u32 %v1226, 2147483648
  %v1228 = vmul.f32 %v1227, 1.442695
  %v1229 = vpow.pop %v1228
  %v1230 = vadd.f32 %v1229, 1.0
  %v1231 = vrcp.pop %v1230
  %v1232 = vmul.f32 1.0, %v1231
  %v1233 = vtanh.pop %v1226
  %v1234 = vmul.f32 %v1232, 0.0
  %1236 = vrot.lane.b32.xlu0 %v1233, 64
  %v1237 = vpop.permute.xlu0 %1236
  %v1239 = vmul.f32 %v1232, %v1237
  %1241 = vrot.lane.b32.xlu0 %v1239, 32
  %v1242 = vpop.permute.xlu0 %1241
  %v1244 = vadd.f32 %v1234, %v1242
  %v1245 = vtanh.pop %v1244
  %1247 = vrot.lane.b32.xlu0 %v1245, 64
  %v1248 = vpop.permute.xlu0 %1247
  %v1250 = vmul.f32 %v1232, %v1248
  %1252 = vrot.lane.b32.xlu0 %v1250, 32
  %v1253 = vpop.permute.xlu0 %1252
  %v1254 = vsel %vm186, %v1253, 0
  %1256 = vmatprep.subr.mxu0 0.0
  %1257 = vmatpush1.msra.mxu0 %v1016
  %1258 = vmatprep.subr.mxu0 0.0
  %1259 = vmatpush1.msra.mxu0 %v1017
  %1260 = vmatprep.subr.mxu0 0.0
  %1261 = vmatpush1.msra.mxu0 %v1018
  %1262 = vmatprep.subr.mxu0 0.0
  %1263 = vmatpush1.msra.mxu0 %v1019
  %1264 = vmatprep.subr.mxu0 0.0
  %1265 = vmatpush1.msra.mxu0 0.0
  %1266 = vmatprep.subr.mxu0 0.0
  %1267 = vmatpush1.msra.mxu0 0.0
  %1268 = vmatprep.subr.mxu0 0.0
  %1269 = vmatpush1.msra.mxu0 0.0
  %1270 = vmatprep.subr.mxu0 0.0
  %1271 = vmatpush1.msra.mxu0 0.0
  %1272 = vmatprep.subr.mxu0 0.0
  %1273 = vmatpush1.msra.mxu0 0.0
  %1274 = vmatprep.subr.mxu0 0.0
  %1275 = vmatpush1.msra.mxu0 0.0
  %1276 = vmatprep.subr.mxu0 0.0
  %1277 = vmatpush1.msra.mxu0 0.0
  %1278 = vmatprep.subr.mxu0 0.0
  %1279 = vmatpush1.msra.mxu0 0.0
  %1280 = vmatprep.subr.mxu0 0.0
  %1281 = vmatpush1.msra.mxu0 0.0
  %1282 = vmatprep.subr.mxu0 0.0
  %1283 = vmatpush1.msra.mxu0 0.0
  %1284 = vmatprep.subr.mxu0 0.0
  %1285 = vmatpush1.msra.mxu0 0.0
  %1286 = vmatprep.subr.mxu0 0.0
  %1287 = vmatpush1.msra.mxu0 0.0
  %1288 = vmatprep.subr.mxu0 0.0
  %1289 = vmatpush1.msra.mxu0 0.0
  %1290 = vmatprep.subr.mxu0 0.0
  %1291 = vmatpush1.msra.mxu0 0.0
  %1292 = vmatprep.subr.mxu0 0.0
  %1293 = vmatpush1.msra.mxu0 0.0
  %1294 = vmatprep.subr.mxu0 0.0
  %1295 = vmatpush1.msra.mxu0 0.0
  %1296 = vmatprep.subr.mxu0 0.0
  %1297 = vmatpush1.msra.mxu0 0.0
  %1298 = vmatprep.subr.mxu0 0.0
  %1299 = vmatpush1.msra.mxu0 0.0
  %1300 = vmatprep.subr.mxu0 0.0
  %1301 = vmatpush1.msra.mxu0 0.0
  %1302 = vmatprep.subr.mxu0 0.0
  %1303 = vmatpush1.msra.mxu0 0.0
  %1304 = vmatprep.subr.mxu0 0.0
  %1305 = vmatpush1.msra.mxu0 0.0
  %1306 = vmatprep.subr.mxu0 0.0
  %1307 = vmatpush1.msra.mxu0 0.0
  %1308 = vmatprep.subr.mxu0 0.0
  %1309 = vmatpush1.msra.mxu0 0.0
  %1310 = vmatprep.subr.mxu0 0.0
  %1311 = vmatpush1.msra.mxu0 0.0
  %1312 = vmatprep.subr.mxu0 0.0
  %1313 = vmatpush1.msra.mxu0 0.0
  %1314 = vmatprep.subr.mxu0 0.0
  %1315 = vmatpush1.msra.mxu0 0.0
  %1316 = vmatprep.subr.mxu0 0.0
  %1317 = vmatpush1.msra.mxu0 0.0
  %1318 = vmatprep.subr.mxu0 0.0
  %1319 = vmatpush1.msra.mxu0 0.0
  %1320 = vmatprep.mubr.f32.mxu0 0.0
  %1321 = vmatmul.mubr.f32.gmra.mrb[0].mxu0 %v1254
  %v1322 = vpop.f32.mrb[0].mxu0
  %v1323 = vadd.f32 0.0, %v1322
  %v1324 = vpop.f32.mrb[0].mxu0
  %1325 = vdwg.mxu0
  %v1326 = vadd.f32 %v1123, %v1323
  %v1327 = vxor.u32 %v1326, 2147483648
  %v1328 = vmul.f32 %v1327, 1.442695
  %v1329 = vpow.pop %v1328
  %v1330 = vadd.f32 %v1329, 1.0
  %v1331 = vrcp.pop %v1330
  %v1332 = vmul.f32 1.0, %v1331
  %v1333 = vtanh.pop %v1326
  %v1334 = vmul.f32 %v1332, %v1244
  %1336 = vrot.lane.b32.xlu0 %v1333, 64
  %v1337 = vpop.permute.xlu0 %1336
  %v1339 = vmul.f32 %v1332, %v1337
  %1341 = vrot.lane.b32.xlu0 %v1339, 32
  %v1342 = vpop.permute.xlu0 %1341
  %v1344 = vadd.f32 %v1334, %v1342
  %v1345 = vtanh.pop %v1344
  %1347 = vrot.lane.b32.xlu0 %v1345, 64
  %v1348 = vpop.permute.xlu0 %1347
  %v1350 = vmul.f32 %v1332, %v1348
  %1352 = vrot.lane.b32.xlu0 %v1350, 32
  %v1353 = vpop.permute.xlu0 %1352
  %v1354 = vsel %vm186, %v1353, 0
  %1356 = vmatprep.subr.mxu0 0.0
  %1357 = vmatpush1.msra.mxu0 %v1016
  %1358 = vmatprep.subr.mxu0 0.0
  %1359 = vmatpush1.msra.mxu0 %v1017
  %1360 = vmatprep.subr.mxu0 0.0
  %1361 = vmatpush1.msra.mxu0 %v1018
  %1362 = vmatprep.subr.mxu0 0.0
  %1363 = vmatpush1.msra.mxu0 %v1019
  %1364 = vmatprep.subr.mxu0 0.0
  %1365 = vmatpush1.msra.mxu0 0.0
  %1366 = vmatprep.subr.mxu0 0.0
  %1367 = vmatpush1.msra.mxu0 0.0
  %1368 = vmatprep.subr.mxu0 0.0
  %1369 = vmatpush1.msra.mxu0 0.0
  %1370 = vmatprep.subr.mxu0 0.0
  %1371 = vmatpush1.msra.mxu0 0.0
  %1372 = vmatprep.subr.mxu0 0.0
  %1373 = vmatpush1.msra.mxu0 0.0
  %1374 = vmatprep.subr.mxu0 0.0
  %1375 = vmatpush1.msra.mxu0 0.0
  %1376 = vmatprep.subr.mxu0 0.0
  %1377 = vmatpush1.msra.mxu0 0.0
  %1378 = vmatprep.subr.mxu0 0.0
  %1379 = vmatpush1.msra.mxu0 0.0
  %1380 = vmatprep.subr.mxu0 0.0
  %1381 = vmatpush1.msra.mxu0 0.0
  %1382 = vmatprep.subr.mxu0 0.0
  %1383 = vmatpush1.msra.mxu0 0.0
  %1384 = vmatprep.subr.mxu0 0.0
  %1385 = vmatpush1.msra.mxu0 0.0
  %1386 = vmatprep.subr.mxu0 0.0
  %1387 = vmatpush1.msra.mxu0 0.0
  %1388 = vmatprep.subr.mxu0 0.0
  %1389 = vmatpush1.msra.mxu0 0.0
  %1390 = vmatprep.subr.mxu0 0.0
  %1391 = vmatpush1.msra.mxu0 0.0
  %1392 = vmatprep.subr.mxu0 0.0
  %1393 = vmatpush1.msra.mxu0 0.0
  %1394 = vmatprep.subr.mxu0 0.0
  %1395 = vmatpush1.msra.mxu0 0.0
  %1396 = vmatprep.subr.mxu0 0.0
  %1397 = vmatpush1.msra.mxu0 0.0
  %1398 = vmatprep.subr.mxu0 0.0
  %1399 = vmatpush1.msra.mxu0 0.0
  %1400 = vmatprep.subr.mxu0 0.0
  %1401 = vmatpush1.msra.mxu0 0.0
  %1402 = vmatprep.subr.mxu0 0.0
  %1403 = vmatpush1.msra.mxu0 0.0
  %1404 = vmatprep.subr.mxu0 0.0
  %1405 = vmatpush1.msra.mxu0 0.0
  %1406 = vmatprep.subr.mxu0 0.0
  %1407 = vmatpush1.msra.mxu0 0.0
  %1408 = vmatprep.subr.mxu0 0.0
  %1409 = vmatpush1.msra.mxu0 0.0
  %1410 = vmatprep.subr.mxu0 0.0
  %1411 = vmatpush1.msra.mxu0 0.0
  %1412 = vmatprep.subr.mxu0 0.0
  %1413 = vmatpush1.msra.mxu0 0.0
  %1414 = vmatprep.subr.mxu0 0.0
  %1415 = vmatpush1.msra.mxu0 0.0
  %1416 = vmatprep.subr.mxu0 0.0
  %1417 = vmatpush1.msra.mxu0 0.0
  %1418 = vmatprep.subr.mxu0 0.0
  %1419 = vmatpush1.msra.mxu0 0.0
  %1420 = vmatprep.mubr.f32.mxu0 0.0
  %1421 = vmatmul.mubr.f32.gmra.mrb[0].mxu0 %v1354
  %v1422 = vpop.f32.mrb[0].mxu0
  %v1423 = vadd.f32 0.0, %v1422
  %v1424 = vpop.f32.mrb[0].mxu0
  %1425 = vdwg.mxu0
  %v1426 = vadd.f32 %v1128, %v1423
  %v1427 = vxor.u32 %v1426, 2147483648
  %v1428 = vmul.f32 %v1427, 1.442695
  %v1429 = vpow.pop %v1428
  %v1430 = vadd.f32 %v1429, 1.0
  %v1431 = vrcp.pop %v1430
  %v1432 = vmul.f32 1.0, %v1431
  %v1433 = vtanh.pop %v1426
  %v1434 = vmul.f32 %v1432, %v1344
  %1436 = vrot.lane.b32.xlu0 %v1433, 64
  %v1437 = vpop.permute.xlu0 %1436
  %v1439 = vmul.f32 %v1432, %v1437
  %1441 = vrot.lane.b32.xlu0 %v1439, 32
  %v1442 = vpop.permute.xlu0 %1441
  %v1444 = vadd.f32 %v1434, %v1442
  %v1445 = vtanh.pop %v1444
  %1447 = vrot.lane.b32.xlu0 %v1445, 64
  %v1448 = vpop.permute.xlu0 %1447
  %v1450 = vmul.f32 %v1432, %v1448
  %1452 = vrot.lane.b32.xlu0 %v1450, 32
  %v1453 = vpop.permute.xlu0 %1452
  %v1454 = vsel %vm186, %v1453, 0
  %1456 = vmatprep.subr.mxu0 0.0
  %1457 = vmatpush1.msra.mxu0 %v1016
  %1458 = vmatprep.subr.mxu0 0.0
  %1459 = vmatpush1.msra.mxu0 %v1017
  %1460 = vmatprep.subr.mxu0 0.0
  %1461 = vmatpush1.msra.mxu0 %v1018
  %1462 = vmatprep.subr.mxu0 0.0
  %1463 = vmatpush1.msra.mxu0 %v1019
  %1464 = vmatprep.subr.mxu0 0.0
  %1465 = vmatpush1.msra.mxu0 0.0
  %1466 = vmatprep.subr.mxu0 0.0
  %1467 = vmatpush1.msra.mxu0 0.0
  %1468 = vmatprep.subr.mxu0 0.0
  %1469 = vmatpush1.msra.mxu0 0.0
  %1470 = vmatprep.subr.mxu0 0.0
  %1471 = vmatpush1.msra.mxu0 0.0
  %1472 = vmatprep.subr.mxu0 0.0
  %1473 = vmatpush1.msra.mxu0 0.0
  %1474 = vmatprep.subr.mxu0 0.0
  %1475 = vmatpush1.msra.mxu0 0.0
  %1476 = vmatprep.subr.mxu0 0.0
  %1477 = vmatpush1.msra.mxu0 0.0
  %1478 = vmatprep.subr.mxu0 0.0
  %1479 = vmatpush1.msra.mxu0 0.0
  %1480 = vmatprep.subr.mxu0 0.0
  %1481 = vmatpush1.msra.mxu0 0.0
  %1482 = vmatprep.subr.mxu0 0.0
  %1483 = vmatpush1.msra.mxu0 0.0
  %1484 = vmatprep.subr.mxu0 0.0
  %1485 = vmatpush1.msra.mxu0 0.0
  %1486 = vmatprep.subr.mxu0 0.0
  %1487 = vmatpush1.msra.mxu0 0.0
  %1488 = vmatprep.subr.mxu0 0.0
  %1489 = vmatpush1.msra.mxu0 0.0
  %1490 = vmatprep.subr.mxu0 0.0
  %1491 = vmatpush1.msra.mxu0 0.0
  %1492 = vmatprep.subr.mxu0 0.0
  %1493 = vmatpush1.msra.mxu0 0.0
  %1494 = vmatprep.subr.mxu0 0.0
  %1495 = vmatpush1.msra.mxu0 0.0
  %1496 = vmatprep.subr.mxu0 0.0
  %1497 = vmatpush1.msra.mxu0 0.0
  %1498 = vmatprep.subr.mxu0 0.0
  %1499 = vmatpush1.msra.mxu0 0.0
  %1500 = vmatprep.subr.mxu0 0.0
  %1501 = vmatpush1.msra.mxu0 0.0
  %1502 = vmatprep.subr.mxu0 0.0
  %1503 = vmatpush1.msra.mxu0 0.0
  %1504 = vmatprep.subr.mxu0 0.0
  %1505 = vmatpush1.msra.mxu0 0.0
  %1506 = vmatprep.subr.mxu0 0.0
  %1507 = vmatpush1.msra.mxu0 0.0
  %1508 = vmatprep.subr.mxu0 0.0
  %1509 = vmatpush1.msra.mxu0 0.0
  %1510 = vmatprep.subr.mxu0 0.0
  %1511 = vmatpush1.msra.mxu0 0.0
  %1512 = vmatprep.subr.mxu0 0.0
  %1513 = vmatpush1.msra.mxu0 0.0
  %1514 = vmatprep.subr.mxu0 0.0
  %1515 = vmatpush1.msra.mxu0 0.0
  %1516 = vmatprep.subr.mxu0 0.0
  %1517 = vmatpush1.msra.mxu0 0.0
  %1518 = vmatprep.subr.mxu0 0.0
  %1519 = vmatpush1.msra.mxu0 0.0
  %1520 = vmatprep.mubr.f32.mxu0 0.0
  %1521 = vmatmul.mubr.f32.gmra.mrb[0].mxu0 %v1454
  %v1522 = vpop.f32.mrb[0].mxu0
  %v1523 = vadd.f32 0.0, %v1522
  %v1524 = vpop.f32.mrb[0].mxu0
  %1525 = vdwg.mxu0
  %v1526 = vadd.f32 %v1133, %v1523
  %v1527 = vxor.u32 %v1526, 2147483648
  %v1528 = vmul.f32 %v1527, 1.442695
  %v1529 = vpow.pop %v1528
  %v1530 = vadd.f32 %v1529, 1.0
  %v1531 = vrcp.pop %v1530
  %v1532 = vmul.f32 1.0, %v1531
  %v1533 = vtanh.pop %v1526
  %v1534 = vmul.f32 %v1532, %v1444
  %1536 = vrot.lane.b32.xlu0 %v1533, 64
  %v1537 = vpop.permute.xlu0 %1536
  %v1539 = vmul.f32 %v1532, %v1537
  %1541 = vrot.lane.b32.xlu0 %v1539, 32
  %v1542 = vpop.permute.xlu0 %1541
  %v1544 = vadd.f32 %v1534, %v1542
  %v1545 = vtanh.pop %v1544
  %1547 = vrot.lane.b32.xlu0 %v1545, 64
  %v1548 = vpop.permute.xlu0 %1547
  %v1550 = vmul.f32 %v1532, %v1548
  %1552 = vrot.lane.b32.xlu0 %v1550, 32
  %v1553 = vpop.permute.xlu0 %1552
  %v1554 = vsel %vm186, %v1553, 0
  %1556 = vmatprep.subr.mxu0 0.0
  %1557 = vmatpush1.msra.mxu0 %v1016
  %1558 = vmatprep.subr.mxu0 0.0
  %1559 = vmatpush1.msra.mxu0 %v1017
  %1560 = vmatprep.subr.mxu0 0.0
  %1561 = vmatpush1.msra.mxu0 %v1018
  %1562 = vmatprep.subr.mxu0 0.0
  %1563 = vmatpush1.msra.mxu0 %v1019
  %1564 = vmatprep.subr.mxu0 0.0
  %1565 = vmatpush1.msra.mxu0 0.0
  %1566 = vmatprep.subr.mxu0 0.0
  %1567 = vmatpush1.msra.mxu0 0.0
  %1568 = vmatprep.subr.mxu0 0.0
  %1569 = vmatpush1.msra.mxu0 0.0
  %1570 = vmatprep.subr.mxu0 0.0
  %1571 = vmatpush1.msra.mxu0 0.0
  %1572 = vmatprep.subr.mxu0 0.0
  %1573 = vmatpush1.msra.mxu0 0.0
  %1574 = vmatprep.subr.mxu0 0.0
  %1575 = vmatpush1.msra.mxu0 0.0
  %1576 = vmatprep.subr.mxu0 0.0
  %1577 = vmatpush1.msra.mxu0 0.0
  %1578 = vmatprep.subr.mxu0 0.0
  %1579 = vmatpush1.msra.mxu0 0.0
  %1580 = vmatprep.subr.mxu0 0.0
  %1581 = vmatpush1.msra.mxu0 0.0
  %1582 = vmatprep.subr.mxu0 0.0
  %1583 = vmatpush1.msra.mxu0 0.0
  %1584 = vmatprep.subr.mxu0 0.0
  %1585 = vmatpush1.msra.mxu0 0.0
  %1586 = vmatprep.subr.mxu0 0.0
  %1587 = vmatpush1.msra.mxu0 0.0
  %1588 = vmatprep.subr.mxu0 0.0
  %1589 = vmatpush1.msra.mxu0 0.0
  %1590 = vmatprep.subr.mxu0 0.0
  %1591 = vmatpush1.msra.mxu0 0.0
  %1592 = vmatprep.subr.mxu0 0.0
  %1593 = vmatpush1.msra.mxu0 0.0
  %1594 = vmatprep.subr.mxu0 0.0
  %1595 = vmatpush1.msra.mxu0 0.0
  %1596 = vmatprep.subr.mxu0 0.0
  %1597 = vmatpush1.msra.mxu0 0.0
  %1598 = vmatprep.subr.mxu0 0.0
  %1599 = vmatpush1.msra.mxu0 0.0
  %1600 = vmatprep.subr.mxu0 0.0
  %1601 = vmatpush1.msra.mxu0 0.0
  %1602 = vmatprep.subr.mxu0 0.0
  %1603 = vmatpush1.msra.mxu0 0.0
  %1604 = vmatprep.subr.mxu0 0.0
  %1605 = vmatpush1.msra.mxu0 0.0
  %1606 = vmatprep.subr.mxu0 0.0
  %1607 = vmatpush1.msra.mxu0 0.0
  %1608 = vmatprep.subr.mxu0 0.0
  %1609 = vmatpush1.msra.mxu0 0.0
  %1610 = vmatprep.subr.mxu0 0.0
  %1611 = vmatpush1.msra.mxu0 0.0
  %1612 = vmatprep.subr.mxu0 0.0
  %1613 = vmatpush1.msra.mxu0 0.0
  %1614 = vmatprep.subr.mxu0 0.0
  %1615 = vmatpush1.msra.mxu0 0.0
  %1616 = vmatprep.subr.mxu0 0.0
  %1617 = vmatpush1.msra.mxu0 0.0
  %1618 = vmatprep.subr.mxu0 0.0
  %1619 = vmatpush1.msra.mxu0 0.0
  %1620 = vmatprep.mubr.f32.mxu0 0.0
  %1621 = vmatmul.mubr.f32.gmra.mrb[0].mxu0 %v1554
  %v1622 = vpop.f32.mrb[0].mxu0
  %v1623 = vadd.f32 0.0, %v1622
  %v1624 = vpop.f32.mrb[0].mxu0
  %1625 = vdwg.mxu0
  %v1626 = vadd.f32 %v1138, %v1623
  %v1627 = vxor.u32 %v1626, 2147483648
  %v1628 = vmul.f32 %v1627, 1.442695
  %v1629 = vpow.pop %v1628
  %v1630 = vadd.f32 %v1629, 1.0
  %v1631 = vrcp.pop %v1630
  %v1632 = vmul.f32 1.0, %v1631
  %v1633 = vtanh.pop %v1626
  %v1634 = vmul.f32 %v1632, %v1544
  %1636 = vrot.lane.b32.xlu0 %v1633, 64
  %v1637 = vpop.permute.xlu0 %1636
  %v1639 = vmul.f32 %v1632, %v1637
  %1641 = vrot.lane.b32.xlu0 %v1639, 32
  %v1642 = vpop.permute.xlu0 %1641
  %v1644 = vadd.f32 %v1634, %v1642
  %v1645 = vtanh.pop %v1644
  %1647 = vrot.lane.b32.xlu0 %v1645, 64
  %v1648 = vpop.permute.xlu0 %1647
  %v1650 = vmul.f32 %v1632, %v1648
  %1652 = vrot.lane.b32.xlu0 %v1650, 32
  %v1653 = vpop.permute.xlu0 %1652
  %v1654 = vsel %vm186, %v1653, 0
  %1656 = vmatprep.subr.mxu0 0.0
  %1657 = vmatpush1.msra.mxu0 %v1016
  %1658 = vmatprep.subr.mxu0 0.0
  %1659 = vmatpush1.msra.mxu0 %v1017
  %1660 = vmatprep.subr.mxu0 0.0
  %1661 = vmatpush1.msra.mxu0 %v1018
  %1662 = vmatprep.subr.mxu0 0.0
  %1663 = vmatpush1.msra.mxu0 %v1019
  %1664 = vmatprep.subr.mxu0 0.0
  %1665 = vmatpush1.msra.mxu0 0.0
  %1666 = vmatprep.subr.mxu0 0.0
  %1667 = vmatpush1.msra.mxu0 0.0
  %1668 = vmatprep.subr.mxu0 0.0
  %1669 = vmatpush1.msra.mxu0 0.0
  %1670 = vmatprep.subr.mxu0 0.0
  %1671 = vmatpush1.msra.mxu0 0.0
  %1672 = vmatprep.subr.mxu0 0.0
  %1673 = vmatpush1.msra.mxu0 0.0
  %1674 = vmatprep.subr.mxu0 0.0
  %1675 = vmatpush1.msra.mxu0 0.0
  %1676 = vmatprep.subr.mxu0 0.0
  %1677 = vmatpush1.msra.mxu0 0.0
  %1678 = vmatprep.subr.mxu0 0.0
  %1679 = vmatpush1.msra.mxu0 0.0
  %1680 = vmatprep.subr.mxu0 0.0
  %1681 = vmatpush1.msra.mxu0 0.0
  %1682 = vmatprep.subr.mxu0 0.0
  %1683 = vmatpush1.msra.mxu0 0.0
  %1684 = vmatprep.subr.mxu0 0.0
  %1685 = vmatpush1.msra.mxu0 0.0
  %1686 = vmatprep.subr.mxu0 0.0
  %1687 = vmatpush1.msra.mxu0 0.0
  %1688 = vmatprep.subr.mxu0 0.0
  %1689 = vmatpush1.msra.mxu0 0.0
  %1690 = vmatprep.subr.mxu0 0.0
  %1691 = vmatpush1.msra.mxu0 0.0
  %1692 = vmatprep.subr.mxu0 0.0
  %1693 = vmatpush1.msra.mxu0 0.0
  %1694 = vmatprep.subr.mxu0 0.0
  %1695 = vmatpush1.msra.mxu0 0.0
  %1696 = vmatprep.subr.mxu0 0.0
  %1697 = vmatpush1.msra.mxu0 0.0
  %1698 = vmatprep.subr.mxu0 0.0
  %1699 = vmatpush1.msra.mxu0 0.0
  %1700 = vmatprep.subr.mxu0 0.0
  %1701 = vmatpush1.msra.mxu0 0.0
  %1702 = vmatprep.subr.mxu0 0.0
  %1703 = vmatpush1.msra.mxu0 0.0
  %1704 = vmatprep.subr.mxu0 0.0
  %1705 = vmatpush1.msra.mxu0 0.0
  %1706 = vmatprep.subr.mxu0 0.0
  %1707 = vmatpush1.msra.mxu0 0.0
  %1708 = vmatprep.subr.mxu0 0.0
  %1709 = vmatpush1.msra.mxu0 0.0
  %1710 = vmatprep.subr.mxu0 0.0
  %1711 = vmatpush1.msra.mxu0 0.0
  %1712 = vmatprep.subr.mxu0 0.0
  %1713 = vmatpush1.msra.mxu0 0.0
  %1714 = vmatprep.subr.mxu0 0.0
  %1715 = vmatpush1.msra.mxu0 0.0
  %1716 = vmatprep.subr.mxu0 0.0
  %1717 = vmatpush1.msra.mxu0 0.0
  %1718 = vmatprep.subr.mxu0 0.0
  %1719 = vmatpush1.msra.mxu0 0.0
  %1720 = vmatprep.mubr.f32.mxu0 0.0
  %1721 = vmatmul.mubr.f32.gmra.mrb[0].mxu0 %v1654
  %v1722 = vpop.f32.mrb[0].mxu0
  %v1723 = vadd.f32 0.0, %v1722
  %v1724 = vpop.f32.mrb[0].mxu0
  %1725 = vdwg.mxu0
  %v1726 = vadd.f32 %v1143, %v1723
  %v1727 = vxor.u32 %v1726, 2147483648
  %v1728 = vmul.f32 %v1727, 1.442695
  %v1729 = vpow.pop %v1728
  %v1730 = vadd.f32 %v1729, 1.0
  %v1731 = vrcp.pop %v1730
  %v1732 = vmul.f32 1.0, %v1731
  %v1733 = vtanh.pop %v1726
  %v1734 = vmul.f32 %v1732, %v1644
  %1736 = vrot.lane.b32.xlu0 %v1733, 64
  %v1737 = vpop.permute.xlu0 %1736
  %v1739 = vmul.f32 %v1732, %v1737
  %1741 = vrot.lane.b32.xlu0 %v1739, 32
  %v1742 = vpop.permute.xlu0 %1741
  %v1744 = vadd.f32 %v1734, %v1742
  %v1745 = vtanh.pop %v1744
  %1747 = vrot.lane.b32.xlu0 %v1745, 64
  %v1748 = vpop.permute.xlu0 %1747
  %v1750 = vmul.f32 %v1732, %v1748
  %1752 = vrot.lane.b32.xlu0 %v1750, 32
  %v1753 = vpop.permute.xlu0 %1752
  %v1754 = vsel %vm186, %v1753, 0
  %1756 = vmatprep.subr.mxu0 0.0
  %1757 = vmatpush1.msra.mxu0 %v1016
  %1758 = vmatprep.subr.mxu0 0.0
  %1759 = vmatpush1.msra.mxu0 %v1017
  %1760 = vmatprep.subr.mxu0 0.0
  %1761 = vmatpush1.msra.mxu0 %v1018
  %1762 = vmatprep.subr.mxu0 0.0
  %1763 = vmatpush1.msra.mxu0 %v1019
  %1764 = vmatprep.subr.mxu0 0.0
  %1765 = vmatpush1.msra.mxu0 0.0
  %1766 = vmatprep.subr.mxu0 0.0
  %1767 = vmatpush1.msra.mxu0 0.0
  %1768 = vmatprep.subr.mxu0 0.0
  %1769 = vmatpush1.msra.mxu0 0.0
  %1770 = vmatprep.subr.mxu0 0.0
  %1771 = vmatpush1.msra.mxu0 0.0
  %1772 = vmatprep.subr.mxu0 0.0
  %1773 = vmatpush1.msra.mxu0 0.0
  %1774 = vmatprep.subr.mxu0 0.0
  %1775 = vmatpush1.msra.mxu0 0.0
  %1776 = vmatprep.subr.mxu0 0.0
  %1777 = vmatpush1.msra.mxu0 0.0
  %1778 = vmatprep.subr.mxu0 0.0
  %1779 = vmatpush1.msra.mxu0 0.0
  %1780 = vmatprep.subr.mxu0 0.0
  %1781 = vmatpush1.msra.mxu0 0.0
  %1782 = vmatprep.subr.mxu0 0.0
  %1783 = vmatpush1.msra.mxu0 0.0
  %1784 = vmatprep.subr.mxu0 0.0
  %1785 = vmatpush1.msra.mxu0 0.0
  %1786 = vmatprep.subr.mxu0 0.0
  %1787 = vmatpush1.msra.mxu0 0.0
  %1788 = vmatprep.subr.mxu0 0.0
  %1789 = vmatpush1.msra.mxu0 0.0
  %1790 = vmatprep.subr.mxu0 0.0
  %1791 = vmatpush1.msra.mxu0 0.0
  %1792 = vmatprep.subr.mxu0 0.0
  %1793 = vmatpush1.msra.mxu0 0.0
  %1794 = vmatprep.subr.mxu0 0.0
  %1795 = vmatpush1.msra.mxu0 0.0
  %1796 = vmatprep.subr.mxu0 0.0
  %1797 = vmatpush1.msra.mxu0 0.0
  %1798 = vmatprep.subr.mxu0 0.0
  %1799 = vmatpush1.msra.mxu0 0.0
  %1800 = vmatprep.subr.mxu0 0.0
  %1801 = vmatpush1.msra.mxu0 0.0
  %1802 = vmatprep.subr.mxu0 0.0
  %1803 = vmatpush1.msra.mxu0 0.0
  %1804 = vmatprep.subr.mxu0 0.0
  %1805 = vmatpush1.msra.mxu0 0.0
  %1806 = vmatprep.subr.mxu0 0.0
  %1807 = vmatpush1.msra.mxu0 0.0
  %1808 = vmatprep.subr.mxu0 0.0
  %1809 = vmatpush1.msra.mxu0 0.0
  %1810 = vmatprep.subr.mxu0 0.0
  %1811 = vmatpush1.msra.mxu0 0.0
  %1812 = vmatprep.subr.mxu0 0.0
  %1813 = vmatpush1.msra.mxu0 0.0
  %1814 = vmatprep.subr.mxu0 0.0
  %1815 = vmatpush1.msra.mxu0 0.0
  %1816 = vmatprep.subr.mxu0 0.0
  %1817 = vmatpush1.msra.mxu0 0.0
  %1818 = vmatprep.subr.mxu0 0.0
  %1819 = vmatpush1.msra.mxu0 0.0
  %1820 = vmatprep.mubr.f32.mxu0 0.0
  %1821 = vmatmul.mubr.f32.gmra.mrb[0].mxu0 %v1754
  %v1822 = vpop.f32.mrb[0].mxu0
  %v1823 = vadd.f32 0.0, %v1822
  %v1824 = vpop.f32.mrb[0].mxu0
  %1825 = vdwg.mxu0
  %v1826 = vadd.f32 %v1148, %v1823
  %v1827 = vxor.u32 %v1826, 2147483648
  %v1828 = vmul.f32 %v1827, 1.442695
  %v1829 = vpow.pop %v1828
  %v1830 = vadd.f32 %v1829, 1.0
  %v1831 = vrcp.pop %v1830
  %v1832 = vmul.f32 1.0, %v1831
  %v1833 = vtanh.pop %v1826
  %v1834 = vmul.f32 %v1832, %v1744
  %1836 = vrot.lane.b32.xlu0 %v1833, 64
  %v1837 = vpop.permute.xlu0 %1836
  %v1839 = vmul.f32 %v1832, %v1837
  %1841 = vrot.lane.b32.xlu0 %v1839, 32
  %v1842 = vpop.permute.xlu0 %1841
  %v1844 = vadd.f32 %v1834, %v1842
  %v1845 = vtanh.pop %v1844
  %1847 = vrot.lane.b32.xlu0 %v1845, 64
  %v1848 = vpop.permute.xlu0 %1847
  %v1850 = vmul.f32 %v1832, %v1848
  %1852 = vrot.lane.b32.xlu0 %v1850, 32
  %v1853 = vpop.permute.xlu0 %1852
  %v1854 = vsel %vm186, %v1853, 0
  %1856 = vmatprep.subr.mxu0 0.0
  %1857 = vmatpush1.msra.mxu0 %v1016
  %1858 = vmatprep.subr.mxu0 0.0
  %1859 = vmatpush1.msra.mxu0 %v1017
  %1860 = vmatprep.subr.mxu0 0.0
  %1861 = vmatpush1.msra.mxu0 %v1018
  %1862 = vmatprep.subr.mxu0 0.0
  %1863 = vmatpush1.msra.mxu0 %v1019
  %1864 = vmatprep.subr.mxu0 0.0
  %1865 = vmatpush1.msra.mxu0 0.0
  %1866 = vmatprep.subr.mxu0 0.0
  %1867 = vmatpush1.msra.mxu0 0.0
  %1868 = vmatprep.subr.mxu0 0.0
  %1869 = vmatpush1.msra.mxu0 0.0
  %1870 = vmatprep.subr.mxu0 0.0
  %1871 = vmatpush1.msra.mxu0 0.0
  %1872 = vmatprep.subr.mxu0 0.0
  %1873 = vmatpush1.msra.mxu0 0.0
  %1874 = vmatprep.subr.mxu0 0.0
  %1875 = vmatpush1.msra.mxu0 0.0
  %1876 = vmatprep.subr.mxu0 0.0
  %1877 = vmatpush1.msra.mxu0 0.0
  %1878 = vmatprep.subr.mxu0 0.0
  %1879 = vmatpush1.msra.mxu0 0.0
  %1880 = vmatprep.subr.mxu0 0.0
  %1881 = vmatpush1.msra.mxu0 0.0
  %1882 = vmatprep.subr.mxu0 0.0
  %1883 = vmatpush1.msra.mxu0 0.0
  %1884 = vmatprep.subr.mxu0 0.0
  %1885 = vmatpush1.msra.mxu0 0.0
  %1886 = vmatprep.subr.mxu0 0.0
  %1887 = vmatpush1.msra.mxu0 0.0
  %1888 = vmatprep.subr.mxu0 0.0
  %1889 = vmatpush1.msra.mxu0 0.0
  %1890 = vmatprep.subr.mxu0 0.0
  %1891 = vmatpush1.msra.mxu0 0.0
  %1892 = vmatprep.subr.mxu0 0.0
  %1893 = vmatpush1.msra.mxu0 0.0
  %1894 = vmatprep.subr.mxu0 0.0
  %1895 = vmatpush1.msra.mxu0 0.0
  %1896 = vmatprep.subr.mxu0 0.0
  %1897 = vmatpush1.msra.mxu0 0.0
  %1898 = vmatprep.subr.mxu0 0.0
  %1899 = vmatpush1.msra.mxu0 0.0
  %1900 = vmatprep.subr.mxu0 0.0
  %1901 = vmatpush1.msra.mxu0 0.0
  %1902 = vmatprep.subr.mxu0 0.0
  %1903 = vmatpush1.msra.mxu0 0.0
  %1904 = vmatprep.subr.mxu0 0.0
  %1905 = vmatpush1.msra.mxu0 0.0
  %1906 = vmatprep.subr.mxu0 0.0
  %1907 = vmatpush1.msra.mxu0 0.0
  %1908 = vmatprep.subr.mxu0 0.0
  %1909 = vmatpush1.msra.mxu0 0.0
  %1910 = vmatprep.subr.mxu0 0.0
  %1911 = vmatpush1.msra.mxu0 0.0
  %1912 = vmatprep.subr.mxu0 0.0
  %1913 = vmatpush1.msra.mxu0 0.0
  %1914 = vmatprep.subr.mxu0 0.0
  %1915 = vmatpush1.msra.mxu0 0.0
  %1916 = vmatprep.subr.mxu0 0.0
  %1917 = vmatpush1.msra.mxu0 0.0
  %1918 = vmatprep.subr.mxu0 0.0
  %1919 = vmatpush1.msra.mxu0 0.0
  %1920 = vmatprep.mubr.f32.mxu0 0.0
  %1921 = vmatmul.mubr.f32.gmra.mrb[0].mxu0 %v1854
  %v1922 = vpop.f32.mrb[0].mxu0
  %v1923 = vadd.f32 0.0, %v1922
  %v1924 = vpop.f32.mrb[0].mxu0
  %1925 = vdwg.mxu0
  %v1926 = vadd.f32 %v1153, %v1923
  %v1927 = vxor.u32 %v1926, 2147483648
  %v1928 = vmul.f32 %v1927, 1.442695
  %v1929 = vpow.pop %v1928
  %v1930 = vadd.f32 %v1929, 1.0
  %v1931 = vrcp.pop %v1930
  %v1932 = vmul.f32 1.0, %v1931
  %v1933 = vtanh.pop %v1926
  %v1934 = vmul.f32 %v1932, %v1844
  %1936 = vrot.lane.b32.xlu0 %v1933, 64
  %v1937 = vpop.permute.xlu0 %1936
  %v1939 = vmul.f32 %v1932, %v1937
  %1941 = vrot.lane.b32.xlu0 %v1939, 32
  %v1942 = vpop.permute.xlu0 %1941
  %v1944 = vadd.f32 %v1934, %v1942
  %v1945 = vtanh.pop %v1944
  %1947 = vrot.lane.b32.xlu0 %v1945, 64
  %v1948 = vpop.permute.xlu0 %1947
  %v1950 = vmul.f32 %v1932, %v1948
  %v1951 = vld [vmem:[%s7] sm:$0xff]
  %v1952 = vld [vmem:[%s7 + $0x8] sm:$0xff]
  %v1953 = vld [vmem:[%s7 + $0x10] sm:$0xff]
  %v1954 = vld [vmem:[%s7 + $0x18] sm:$0xff]
  %v1955 = vld [vmem:[%s8] sm:$0x1]
  %v1957 = vlaneseq
  %v1958 = vshrl.u32 %v1957, 7
  %v1959 = vsub.s32 0, %v1958
  %v1960 = vrot.slane %v1955, %v1959
  %1963 = vrot.lane.b32.xlu0 %v1950, 32
  %v1964 = vpop.permute.xlu0 %1963
  %v1965 = vsel %vm186, %v1964, 0
  %1967 = vmatprep.subr.mxu0 0.0
  %1968 = vmatpush1.msra.mxu0 %v1951
  %1969 = vmatprep.subr.mxu0 0.0
  %1970 = vmatpush1.msra.mxu0 %v1952
  %1971 = vmatprep.subr.mxu0 0.0
  %1972 = vmatpush1.msra.mxu0 %v1953
  %1973 = vmatprep.subr.mxu0 0.0
  %1974 = vmatpush1.msra.mxu0 %v1954
  %1975 = vmatprep.subr.mxu0 0.0
  %1976 = vmatpush1.msra.mxu0 0.0
  %1977 = vmatprep.subr.mxu0 0.0
  %1978 = vmatpush1.msra.mxu0 0.0
  %1979 = vmatprep.subr.mxu0 0.0
  %1980 = vmatpush1.msra.mxu0 0.0
  %1981 = vmatprep.subr.mxu0 0.0
  %1982 = vmatpush1.msra.mxu0 0.0
  %1983 = vmatprep.subr.mxu0 0.0
  %1984 = vmatpush1.msra.mxu0 0.0
  %1985 = vmatprep.subr.mxu0 0.0
  %1986 = vmatpush1.msra.mxu0 0.0
  %1987 = vmatprep.subr.mxu0 0.0
  %1988 = vmatpush1.msra.mxu0 0.0
  %1989 = vmatprep.subr.mxu0 0.0
  %1990 = vmatpush1.msra.mxu0 0.0
  %1991 = vmatprep.subr.mxu0 0.0
  %1992 = vmatpush1.msra.mxu0 0.0
  %1993 = vmatprep.subr.mxu0 0.0
  %1994 = vmatpush1.msra.mxu0 0.0
  %1995 = vmatprep.subr.mxu0 0.0
  %1996 = vmatpush1.msra.mxu0 0.0
  %1997 = vmatprep.subr.mxu0 0.0
  %1998 = vmatpush1.msra.mxu0 0.0
  %1999 = vmatprep.subr.mxu0 0.0
  %2000 = vmatpush1.msra.mxu0 0.0
  %2001 = vmatprep.subr.mxu0 0.0
  %2002 = vmatpush1.msra.mxu0 0.0
  %2003 = vmatprep.subr.mxu0 0.0
  %2004 = vmatpush1.msra.mxu0 0.0
  %2005 = vmatprep.subr.mxu0 0.0
  %2006 = vmatpush1.msra.mxu0 0.0
  %2007 = vmatprep.subr.mxu0 0.0
  %2008 = vmatpush1.msra.mxu0 0.0
  %2009 = vmatprep.subr.mxu0 0.0
  %2010 = vmatpush1.msra.mxu0 0.0
  %2011 = vmatprep.subr.mxu0 0.0
  %2012 = vmatpush1.msra.mxu0 0.0
  %2013 = vmatprep.subr.mxu0 0.0
  %2014 = vmatpush1.msra.mxu0 0.0
  %2015 = vmatprep.subr.mxu0 0.0
  %2016 = vmatpush1.msra.mxu0 0.0
  %2017 = vmatprep.subr.mxu0 0.0
  %2018 = vmatpush1.msra.mxu0 0.0
  %2019 = vmatprep.subr.mxu0 0.0
  %2020 = vmatpush1.msra.mxu0 0.0
  %2021 = vmatprep.subr.mxu0 0.0
  %2022 = vmatpush1.msra.mxu0 0.0
  %2023 = vmatprep.subr.mxu0 0.0
  %2024 = vmatpush1.msra.mxu0 0.0
  %2025 = vmatprep.subr.mxu0 0.0
  %2026 = vmatpush1.msra.mxu0 0.0
  %2027 = vmatprep.subr.mxu0 0.0
  %2028 = vmatpush1.msra.mxu0 0.0
  %2029 = vmatprep.subr.mxu0 0.0
  %2030 = vmatpush1.msra.mxu0 0.0
  %2031 = vmatprep.mubr.f32.mxu0 0.0
  %2032 = vmatmul.mubr.f32.gmra.mrb[0].mxu0 %v1965
  %v2033 = vpop.f32.mrb[0].mxu0
  %v2034 = vadd.f32 %v1960, %v2033
  %v2035 = vpop.f32.mrb[0].mxu0
  %2036 = vdwg.mxu0
  %2037 = vst.msk [vmem:[%s9] sm:$0xff] %vm52, %v2034
  // Predicated region
  $region38: #{tpu_custom_call.1} parent=0 // pred_check
    _
  $region39: #{tpu_custom_call.1} parent=0 // pred_check_branch
    %2039 = sbr.rel (0) target = $region41
  $region40: #{tpu_custom_call.1} parent=0 // pred_region
    _
  $region41: #{tpu_custom_call.1} parent=0 // pred_fallthru
    _
  // Predicated region
  $region42: #{tpu_custom_call.1} parent=0 // pred_check
    _
  $region43: #{tpu_custom_call.1} parent=0 // pred_check_branch
    %2041 = sbr.rel (0) target = $region45
  $region44: #{tpu_custom_call.1} parent=0 // pred_region
    _
  $region45: #{tpu_custom_call.1} parent=0 // pred_fallthru
    _

</llo_original>
